<compile_context>
chip_gen: v7x
topology: tpu7x:2x2x1
jax: 0.10.0
libtpu: 0.0.40
codegen_flags: <defaults>
</compile_context>

<pallas_src>
import functools

import jax
import jax.numpy as jnp
from jax.experimental import pallas as pl
from jax.experimental.pallas import tpu as pltpu

# Backbone feature channels for the 3 scales (stand-in for
# self.features.feature_info.channels() of the timm backbone).
CHANNELS = [8, 16, 32]

VMEM = pltpu.MemorySpace.VMEM


def _round_up(n, m):
    return ((n + m - 1) // m) * m


# ----------------------------- Pallas kernels -----------------------------

def _matmul_bias_act_kernel(x_ref, w_ref, b_ref, o_ref, *, activation):
    """O = act(X @ W + b), bf16 operands, f32 accumulation / post-ops."""
    acc = jnp.dot(x_ref[...], w_ref[...], preferred_element_type=jnp.float32)
    acc = acc + b_ref[...]
    if activation == "relu":
        acc = jnp.maximum(acc, 0.0)
    o_ref[...] = acc.astype(o_ref.dtype)


def pallas_linear(x, w, b, activation="none", out_dtype=jnp.float32):
    """Matmul + bias + activation, tiled over M with a parallel grid axis."""
    M, K = x.shape
    N = w.shape[1]
    tm = 256 if (M % 256 == 0) else M          # M-tiling (only the stem splits)
    grid = (M // tm,)
    flops = 2 * M * K * N
    bytes_accessed = (x.size * x.dtype.itemsize + w.size * w.dtype.itemsize
                      + b.size * 4 + M * N * jnp.dtype(out_dtype).itemsize)
    return pl.pallas_call(
        functools.partial(_matmul_bias_act_kernel, activation=activation),
        out_shape=jax.ShapeDtypeStruct((M, N), out_dtype),
        grid_spec=pltpu.PrefetchScalarGridSpec(
            num_scalar_prefetch=0,
            grid=grid,
            in_specs=[pl.BlockSpec((tm, K), lambda i: (i, 0)),
                      pl.BlockSpec((K, N), lambda i: (0, 0)),
                      pl.BlockSpec((1, N), lambda i: (0, 0))],
            out_specs=pl.BlockSpec((tm, N), lambda i: (i, 0))),
        compiler_params=pltpu.CompilerParams(
            dimension_semantics=("parallel",)),
        cost_estimate=pl.CostEstimate(flops=flops, transcendentals=0,
                                      bytes_accessed=bytes_accessed),
    )(x, w, b.reshape(1, N))


def _ecp_fused_kernel(x0, w0, b0, x1, w1, b1, x2, w2, b2,
                      o0, o1, o2, *, groups):
    """Fused ECP (pos+ori, all 3 scales): 1x1 expand conv + ReLU + adaptive
    avg-pool expressed as an in-kernel aligned row-group reduction."""
    def branch(x_ref, w_ref, b_ref, o_ref, group):
        y = jnp.dot(x_ref[...], w_ref[...], preferred_element_type=jnp.float32)
        y = jnp.maximum(y + b_ref[...], 0.0)
        if group > 1:
            g_rows = o_ref.shape[0]
            acc = y[0:g_rows, :]
            for g in range(1, group):
                acc = acc + y[g * g_rows:(g + 1) * g_rows, :]
            y = acc * (1.0 / group)
        o_ref[...] = y.astype(o_ref.dtype)

    branch(x0, w0, b0, o0, groups[0])
    branch(x1, w1, b1, o1, groups[1])
    branch(x2, w2, b2, o2, groups[2])


def pallas_ecp_fused(xs, ws, bs, metas):
    groups = tuple(int(g) for (_, g) in metas)
    out_shape = tuple(
        jax.ShapeDtypeStruct((metas[i][0], ws[i].shape[1]), jnp.bfloat16)
        for i in range(3))
    ins = []
    for i in range(3):
        ins += [xs[i], ws[i], bs[i].reshape(1, -1)]
    return pl.pallas_call(
        functools.partial(_ecp_fused_kernel, groups=groups),
        out_shape=out_shape,
        in_specs=[pl.BlockSpec(memory_space=VMEM)] * 9,
        out_specs=tuple(pl.BlockSpec(memory_space=VMEM) for _ in range(3)),
    )(*ins)


def _heads_kernel(px_ref, ox_ref, wp_ref, bp_ref, wo_ref, bo_ref, o_ref,
                  *, seg_widths):
    """All four heads in one kernel: pos linear + three segment softmaxes.
    Segments are padded to 128-lane multiples (bias pad = -1e30 so padded
    lanes contribute exp(...)=0); single lane-dense output store.  Softmax is
    normalized with an exact divide so each row sums to 1 in f32."""
    pos = jnp.dot(px_ref[...], wp_ref[...],
                  preferred_element_type=jnp.float32) + bp_ref[...]
    logits = jnp.dot(ox_ref[...], wo_ref[...],
                     preferred_element_type=jnp.float32) + bo_ref[...]
    parts = [pos]
    off = 0
    for width in seg_widths:                       # 128-aligned static slices
        seg = logits[:, off:off + width]
        m = jnp.max(seg, axis=-1, keepdims=True)
        e = jnp.exp(seg - m)
        s = jnp.sum(e, axis=-1, keepdims=True)
        parts.append(e / s)                        # exact normalization
        off += width
    o_ref[...] = jnp.concatenate(parts, axis=-1).astype(o_ref.dtype)


def pallas_heads(pos_flat, ori_flat, pos_head, ori_heads):
    B, K = pos_flat.shape
    wp, bp = pos_head
    n_pos = wp.shape[1]
    n_pos_pad = _round_up(n_pos, 128)
    wp_p = jnp.pad(wp.astype(jnp.bfloat16), ((0, 0), (0, n_pos_pad - n_pos)))
    bp_p = jnp.pad(bp, (0, n_pos_pad - n_pos))

    seg_widths, dims, w_blocks, b_blocks = [], [], [], []
    for (w, b) in ori_heads:
        n = w.shape[1]
        npad = _round_up(n, 128)
        w_blocks.append(jnp.pad(w.astype(jnp.bfloat16),
                                ((0, 0), (0, npad - n))))
        b_blocks.append(jnp.pad(b, (0, npad - n), constant_values=-1e30))
        seg_widths.append(npad)
        dims.append(n)
    wo_p = jnp.concatenate(w_blocks, axis=1)
    bo_p = jnp.concatenate(b_blocks, axis=0)

    out_n = n_pos_pad + sum(seg_widths)
    out = pl.pallas_call(
        functools.partial(_heads_kernel, seg_widths=tuple(seg_widths)),
        out_shape=jax.ShapeDtypeStruct((B, out_n), jnp.float32),
        in_specs=[pl.BlockSpec(memory_space=VMEM)] * 6,
        out_specs=pl.BlockSpec(memory_space=VMEM),
    )(pos_flat, ori_flat, wp_p, bp_p.reshape(1, -1), wo_p, bo_p.reshape(1, -1))

    results = [out[:, :n_pos]]
    off = n_pos_pad
    for n, npad in zip(dims, seg_widths):
        results.append(out[:, off:off + n])
        off += npad
    return results


# ------------------------------- Glue (JAX) --------------------------------

def _im2col_3x3_s2(x):
    """3x3, stride-2, pad-1 patches for NHWC input -> (B*Ho*Wo, 9*C)."""
    B, H, W, C = x.shape
    Ho, Wo = H // 2, W // 2
    xp = jnp.pad(x, ((0, 0), (1, 1), (1, 1), (0, 0)))
    cols = []
    for ki in range(3):
        for kj in range(3):
            cols.append(xp[:, ki:ki + 2 * Ho:2, kj:kj + 2 * Wo:2, :])
    patches = jnp.concatenate(cols, axis=-1)
    return patches.reshape(B * Ho * Wo, 9 * C), (B, Ho, Wo)


def conv3x3_s2_relu(x, w, b):
    rows, (B, Ho, Wo) = _im2col_3x3_s2(x)
    y = pallas_linear(rows, w.astype(jnp.bfloat16), b, activation="relu",
                      out_dtype=jnp.bfloat16)
    return y.reshape(B, Ho, Wo, w.shape[1])


def _ecp_rows(feat, P):
    """Reorder so the pool-group index is the outer (slow) row axis:
    row = g*(B*P*P) + cell, cell = b*P*P + pi*P + pj -> in-kernel pooling is
    a sum of aligned contiguous row blocks."""
    # TODO(synk): matches AdaptiveAvgPool2d only when H, W divide pool_size
    # (true for this config); flatten order is (pi,pj,channel) vs PyTorch's
    # (channel,pi,pj) -- a fixed feature permutation absorbed by the heads.
    B, H, W, C = feat.shape
    h, wd = H // P, W // P
    x = feat.reshape(B, P, h, P, wd, C).transpose(2, 4, 0, 1, 3, 5)
    return x.reshape(h * wd * B * P * P, C), B * P * P, h * wd


# --------------------------- Parameters / model -----------------------------

def init_model(key, config):
    keys = iter(jax.random.split(key, 32))

    def conv_w(cin, cout):
        return (0.1 * jax.random.normal(next(keys), (9 * cin, cout), jnp.float32),
                jnp.zeros((cout,), jnp.float32))

    def lin_w(cin, cout):
        return (0.05 * jax.random.normal(next(keys), (cin, cout), jnp.float32),
                0.01 * jnp.ones((cout,), jnp.float32))

    params = {}
    # TODO(synk): the real model uses a timm backbone chosen by
    # config['backbone']; a tiny synthetic 5-stage stride-2 conv backbone
    # stands in and produces p3/p4/p5.
    params["stem"] = conv_w(3, 4)
    params["s2"] = conv_w(4, 8)
    params["s3"] = conv_w(8, CHANNELS[0])
    params["s4"] = conv_w(CHANNELS[0], CHANNELS[1])
    params["s5"] = conv_w(CHANNELS[1], CHANNELS[2])

    er = config["expand_ratio"]
    # TODO(synk): ECP internals (BN/activation choice) are not given; modeled
    # as 1x1 expand conv + ReLU + adaptive avg pool (matches head_in math).
    for name in ("ecp_pos", "ecp_ori"):
        params[name] = [lin_w(CHANNELS[i], int(CHANNELS[i] * er[i]))
                        for i in range(3)]

    head_in = sum(int(CHANNELS[i] * er[i] * config["pool_size"][i] ** 2)
                  for i in range(3))
    extra = max(config["tau"] * config["sigma"], 3)
    # TODO(synk): Head_single internals unknown; modeled as a single Linear
    # (+ softmax when softmax=True), matching the declared in/out dims.
    params["pos_head"] = lin_w(head_in, 3)
    params["yaw_head"] = lin_w(head_in, int(360 // config["stride"] + 1 + 2 * extra))
    params["pitch_head"] = lin_w(head_in, int(180 // config["stride"] + 1 + 2 * extra))
    params["roll_head"] = lin_w(head_in, int(360 // config["stride"] + 1 + 2 * extra))
    return params


def forward(params, x_nchw, config):
    x = jnp.transpose(x_nchw, (0, 2, 3, 1)).astype(jnp.bfloat16)   # NCHW->NHWC
    x = conv3x3_s2_relu(x, *params["stem"])
    x = conv3x3_s2_relu(x, *params["s2"])
    p3 = conv3x3_s2_relu(x, *params["s3"])
    p4 = conv3x3_s2_relu(p3, *params["s4"])
    p5 = conv3x3_s2_relu(p4, *params["s5"])
    feats = [p3, p4, p5]
    ps = config["pool_size"]
    B = x_nchw.shape[0]

    # --- ECP_pos + ECP_ori, all 3 scales, one fused Pallas kernel ---
    xs, ws, bs, metas = [], [], [], []
    for i in range(3):
        rows, G, group = _ecp_rows(feats[i], ps[i])
        xs.append(rows)
        metas.append((G, group))
        wpos, bpos = params["ecp_pos"][i]
        wori, bori = params["ecp_ori"][i]
        ws.append(jnp.concatenate([wpos, wori], axis=1).astype(jnp.bfloat16))
        bs.append(jnp.concatenate([bpos, bori], axis=0))
    pooled = pallas_ecp_fused(xs, ws, bs, metas)

    # --- RSC: flatten + concat (tiny XLA glue on <2 KiB tensors) ---
    pos_parts, ori_parts = [], []
    for i in range(3):
        Ne = params["ecp_pos"][i][0].shape[1]
        P = ps[i]
        p = pooled[i].reshape(B, P * P, 2 * Ne)
        pos_parts.append(p[:, :, :Ne].reshape(B, P * P * Ne))
        ori_parts.append(p[:, :, Ne:].reshape(B, P * P * Ne))
    pos_flat = jnp.concatenate(pos_parts, axis=-1)      # (B, 256) bf16
    ori_flat = jnp.concatenate(ori_parts, axis=-1)      # (B, 256) bf16

    # --- all four heads fused into one Pallas kernel ---
    pos, yaw, pitch, roll = pallas_heads(
        pos_flat, ori_flat, params["pos_head"],
        [params["yaw_head"], params["pitch_head"], params["roll_head"]])
    return pos, yaw, pitch, roll


# ----------------------------------- main -----------------------------------

if __name__ == "__main__":
    config = dict(
        backbone="synthetic_tiny",
        pretrained=False,
        expand_ratio=[2, 2, 2],
        pool_size=[2, 2, 1],
        tau=1,
        sigma=3,
        stride=5,
    )
    key = jax.random.PRNGKey(0)
    pkey, xkey = jax.random.split(key)
    params = init_model(pkey, config)

    # small input: batch=2, 3 channels, 32x32 -> p3:4x4x8, p4:2x2x16, p5:1x1x32
    x = jax.random.normal(xkey, (2, 3, 32, 32), jnp.float32)

    fwd = jax.jit(lambda inp: forward(params, inp, config))
    pos, yaw, pitch, roll = fwd(x)
    jax.block_until_ready((pos, yaw, pitch, roll))

    assert pos.shape == (2, 3)
    assert yaw.shape == (2, 79)
    assert pitch.shape == (2, 43)
    assert roll.shape == (2, 79)
    # softmax heads are row-normalized (exact divide -> tight tolerance)
    assert bool(jnp.allclose(jnp.sum(yaw, axis=-1), 1.0, atol=1e-3))
    assert bool(jnp.allclose(jnp.sum(pitch, axis=-1), 1.0, atol=1e-3))
    assert bool(jnp.allclose(jnp.sum(roll, axis=-1), 1.0, atol=1e-3))
    print("KERNEL_OK")
</pallas_src>

<mosaic_0001>
module attributes {stable_mosaic.version = 11 : i64} {
  func.func @_matmul_bias_act_kernel(%arg0: i32, %arg1: memref<256x27xbf16, #tpu.memory_space<vmem>>, %arg2: memref<27x4xbf16, #tpu.memory_space<vmem>>, %arg3: memref<1x4xf32, #tpu.memory_space<vmem>>, %arg4: memref<256x4xbf16, #tpu.memory_space<vmem>>) attributes {dimension_semantics = [#tpu.dimension_semantics<parallel>], iteration_bounds = array<i64: 2>, scalar_prefetch = 0 : i64, scratch_operands = 0 : i64, tpu.core_type = #tpu.core_type<tc>, window_params = [{transform_indices = @transform_0, window_bounds = array<i64: 256, 27>}, {pipeline_mode = #tpu.pipeline_mode<synchronous>, transform_indices = @transform_1, window_bounds = array<i64: 27, 4>}, {pipeline_mode = #tpu.pipeline_mode<synchronous>, transform_indices = @transform_2, window_bounds = array<i64: 1, 4>}, {transform_indices = @transform_3, window_bounds = array<i64: 256, 4>}]} {
    %c0 = arith.constant 0 : index
    %c0_0 = arith.constant 0 : index
    %0 = vector.load %arg1[%c0, %c0_0] : memref<256x27xbf16, #tpu.memory_space<vmem>>, vector<256x27xbf16>
    %c0_1 = arith.constant 0 : index
    %c0_2 = arith.constant 0 : index
    %1 = vector.load %arg2[%c0_1, %c0_2] : memref<27x4xbf16, #tpu.memory_space<vmem>>, vector<27x4xbf16>
    %cst = arith.constant dense<0.000000e+00> : vector<256x4xf32>
    %2 = tpu.matmul %0, %1, %cst {dimension_numbers = #tpu.dot_dimension_numbers<[1], [0], [0], [1], [0, 0, 1, 1], [], []>} : vector<256x27xbf16>, vector<27x4xbf16>, vector<256x4xf32> -> vector<256x4xf32>
    %c0_3 = arith.constant 0 : index
    %c0_4 = arith.constant 0 : index
    %3 = vector.load %arg3[%c0_3, %c0_4] : memref<1x4xf32, #tpu.memory_space<vmem>>, vector<1x4xf32>
    %4 = vector.broadcast %3 : vector<1x4xf32> to vector<256x4xf32>
    %5 = arith.addf %2, %4 : vector<256x4xf32>
    %cst_5 = arith.constant 0.000000e+00 : f32
    %6 = vector.broadcast %cst_5 : f32 to vector<256x4xf32>
    %7 = arith.maximumf %5, %6 : vector<256x4xf32>
    %8 = arith.truncf %7 : vector<256x4xf32> to vector<256x4xbf16>
    %c0_6 = arith.constant 0 : index
    %c0_7 = arith.constant 0 : index
    %9 = vector.load %arg4[%c0_6, %c0_7] : memref<256x4xbf16, #tpu.memory_space<vmem>>, vector<256x4xbf16>
    tpu.vector_store %arg4[%c0_6, %c0_7], %8 {strides = array<i32>} : memref<256x4xbf16, #tpu.memory_space<vmem>>, vector<256x4xbf16>,
    return
  }
  func.func @transform_0(%arg0: i32) -> (i32, i32) {
    %c0_i32 = arith.constant 0 : i32
    %c0_i32_0 = arith.constant 0 : i32
    return %arg0, %c0_i32 : i32, i32
  }
  func.func @transform_1(%arg0: i32) -> (i32, i32) {
    %c0_i32 = arith.constant 0 : i32
    %c0_i32_0 = arith.constant 0 : i32
    %c0_i32_1 = arith.constant 0 : i32
    return %c0_i32, %c0_i32_0 : i32, i32
  }
  func.func @transform_2(%arg0: i32) -> (i32, i32) {
    %c0_i32 = arith.constant 0 : i32
    %c0_i32_0 = arith.constant 0 : i32
    %c0_i32_1 = arith.constant 0 : i32
    return %c0_i32, %c0_i32_0 : i32, i32
  }
  func.func @transform_3(%arg0: i32) -> (i32, i32) {
    %c0_i32 = arith.constant 0 : i32
    %c0_i32_0 = arith.constant 0 : i32
    return %arg0, %c0_i32 : i32, i32
  }
}

module attributes {stable_mosaic.version = 11 : i64} {
  func.func @_matmul_bias_act_kernel(%arg0: i32, %arg1: memref<128x36xbf16, #tpu.memory_space<vmem>>, %arg2: memref<36x8xbf16, #tpu.memory_space<vmem>>, %arg3: memref<1x8xf32, #tpu.memory_space<vmem>>, %arg4: memref<128x8xbf16, #tpu.memory_space<vmem>>) attributes {dimension_semantics = [#tpu.dimension_semantics<parallel>], iteration_bounds = array<i64: 1>, scalar_prefetch = 0 : i64, scratch_operands = 0 : i64, tpu.core_type = #tpu.core_type<tc>, window_params = [{transform_indices = @transform_0, window_bounds = array<i64: 128, 36>}, {pipeline_mode = #tpu.pipeline_mode<synchronous>, transform_indices = @transform_1, window_bounds = array<i64: 36, 8>}, {pipeline_mode = #tpu.pipeline_mode<synchronous>, transform_indices = @transform_2, window_bounds = array<i64: 1, 8>}, {transform_indices = @transform_3, window_bounds = array<i64: 128, 8>}]} {
    %c0 = arith.constant 0 : index
    %c0_0 = arith.constant 0 : index
    %0 = vector.load %arg1[%c0, %c0_0] : memref<128x36xbf16, #tpu.memory_space<vmem>>, vector<128x36xbf16>
    %c0_1 = arith.constant 0 : index
    %c0_2 = arith.constant 0 : index
    %1 = vector.load %arg2[%c0_1, %c0_2] : memref<36x8xbf16, #tpu.memory_space<vmem>>, vector<36x8xbf16>
    %cst = arith.constant dense<0.000000e+00> : vector<128x8xf32>
    %2 = tpu.matmul %0, %1, %cst {dimension_numbers = #tpu.dot_dimension_numbers<[1], [0], [0], [1], [0, 0, 1, 1], [], []>} : vector<128x36xbf16>, vector<36x8xbf16>, vector<128x8xf32> -> vector<128x8xf32>
    %c0_3 = arith.constant 0 : index
    %c0_4 = arith.constant 0 : index
    %3 = vector.load %arg3[%c0_3, %c0_4] : memref<1x8xf32, #tpu.memory_space<vmem>>, vector<1x8xf32>
    %4 = vector.broadcast %3 : vector<1x8xf32> to vector<128x8xf32>
    %5 = arith.addf %2, %4 : vector<128x8xf32>
    %cst_5 = arith.constant 0.000000e+00 : f32
    %6 = vector.broadcast %cst_5 : f32 to vector<128x8xf32>
    %7 = arith.maximumf %5, %6 : vector<128x8xf32>
    %8 = arith.truncf %7 : vector<128x8xf32> to vector<128x8xbf16>
    %c0_6 = arith.constant 0 : index
    %c0_7 = arith.constant 0 : index
    %9 = vector.load %arg4[%c0_6, %c0_7] : memref<128x8xbf16, #tpu.memory_space<vmem>>, vector<128x8xbf16>
    tpu.vector_store %arg4[%c0_6, %c0_7], %8 {strides = array<i32>} : memref<128x8xbf16, #tpu.memory_space<vmem>>, vector<128x8xbf16>,
    return
  }
  func.func @transform_0(%arg0: i32) -> (i32, i32) {
    %c0_i32 = arith.constant 0 : i32
    %c0_i32_0 = arith.constant 0 : i32
    return %arg0, %c0_i32 : i32, i32
  }
  func.func @transform_1(%arg0: i32) -> (i32, i32) {
    %c0_i32 = arith.constant 0 : i32
    %c0_i32_0 = arith.constant 0 : i32
    %c0_i32_1 = arith.constant 0 : i32
    return %c0_i32, %c0_i32_0 : i32, i32
  }
  func.func @transform_2(%arg0: i32) -> (i32, i32) {
    %c0_i32 = arith.constant 0 : i32
    %c0_i32_0 = arith.constant 0 : i32
    %c0_i32_1 = arith.constant 0 : i32
    return %c0_i32, %c0_i32_0 : i32, i32
  }
  func.func @transform_3(%arg0: i32) -> (i32, i32) {
    %c0_i32 = arith.constant 0 : i32
    %c0_i32_0 = arith.constant 0 : i32
    return %arg0, %c0_i32 : i32, i32
  }
}

module attributes {stable_mosaic.version = 11 : i64} {
  func.func @_matmul_bias_act_kernel(%arg0: i32, %arg1: memref<32x72xbf16, #tpu.memory_space<vmem>>, %arg2: memref<72x8xbf16, #tpu.memory_space<vmem>>, %arg3: memref<1x8xf32, #tpu.memory_space<vmem>>, %arg4: memref<32x8xbf16, #tpu.memory_space<vmem>>) attributes {dimension_semantics = [#tpu.dimension_semantics<parallel>], iteration_bounds = array<i64: 1>, scalar_prefetch = 0 : i64, scratch_operands = 0 : i64, tpu.core_type = #tpu.core_type<tc>, window_params = [{transform_indices = @transform_0, window_bounds = array<i64: 32, 72>}, {pipeline_mode = #tpu.pipeline_mode<synchronous>, transform_indices = @transform_1, window_bounds = array<i64: 72, 8>}, {pipeline_mode = #tpu.pipeline_mode<synchronous>, transform_indices = @transform_2, window_bounds = array<i64: 1, 8>}, {transform_indices = @transform_3, window_bounds = array<i64: 32, 8>}]} {
    %c0 = arith.constant 0 : index
    %c0_0 = arith.constant 0 : index
    %0 = vector.load %arg1[%c0, %c0_0] : memref<32x72xbf16, #tpu.memory_space<vmem>>, vector<32x72xbf16>
    %c0_1 = arith.constant 0 : index
    %c0_2 = arith.constant 0 : index
    %1 = vector.load %arg2[%c0_1, %c0_2] : memref<72x8xbf16, #tpu.memory_space<vmem>>, vector<72x8xbf16>
    %cst = arith.constant dense<0.000000e+00> : vector<32x8xf32>
    %2 = tpu.matmul %0, %1, %cst {dimension_numbers = #tpu.dot_dimension_numbers<[1], [0], [0], [1], [0, 0, 1, 1], [], []>} : vector<32x72xbf16>, vector<72x8xbf16>, vector<32x8xf32> -> vector<32x8xf32>
    %c0_3 = arith.constant 0 : index
    %c0_4 = arith.constant 0 : index
    %3 = vector.load %arg3[%c0_3, %c0_4] : memref<1x8xf32, #tpu.memory_space<vmem>>, vector<1x8xf32>
    %4 = vector.broadcast %3 : vector<1x8xf32> to vector<32x8xf32>
    %5 = arith.addf %2, %4 : vector<32x8xf32>
    %cst_5 = arith.constant 0.000000e+00 : f32
    %6 = vector.broadcast %cst_5 : f32 to vector<32x8xf32>
    %7 = arith.maximumf %5, %6 : vector<32x8xf32>
    %8 = arith.truncf %7 : vector<32x8xf32> to vector<32x8xbf16>
    %c0_6 = arith.constant 0 : index
    %c0_7 = arith.constant 0 : index
    %9 = vector.load %arg4[%c0_6, %c0_7] : memref<32x8xbf16, #tpu.memory_space<vmem>>, vector<32x8xbf16>
    tpu.vector_store %arg4[%c0_6, %c0_7], %8 {strides = array<i32>} : memref<32x8xbf16, #tpu.memory_space<vmem>>, vector<32x8xbf16>,
    return
  }
  func.func @transform_0(%arg0: i32) -> (i32, i32) {
    %c0_i32 = arith.constant 0 : i32
    %c0_i32_0 = arith.constant 0 : i32
    return %arg0, %c0_i32 : i32, i32
  }
  func.func @transform_1(%arg0: i32) -> (i32, i32) {
    %c0_i32 = arith.constant 0 : i32
    %c0_i32_0 = arith.constant 0 : i32
    %c0_i32_1 = arith.constant 0 : i32
    return %c0_i32, %c0_i32_0 : i32, i32
  }
  func.func @transform_2(%arg0: i32) -> (i32, i32) {
    %c0_i32 = arith.constant 0 : i32
    %c0_i32_0 = arith.constant 0 : i32
    %c0_i32_1 = arith.constant 0 : i32
    return %c0_i32, %c0_i32_0 : i32, i32
  }
  func.func @transform_3(%arg0: i32) -> (i32, i32) {
    %c0_i32 = arith.constant 0 : i32
    %c0_i32_0 = arith.constant 0 : i32
    return %arg0, %c0_i32 : i32, i32
  }
}

module attributes {stable_mosaic.version = 11 : i64} {
  func.func @_matmul_bias_act_kernel(%arg0: i32, %arg1: memref<8x72xbf16, #tpu.memory_space<vmem>>, %arg2: memref<72x16xbf16, #tpu.memory_space<vmem>>, %arg3: memref<1x16xf32, #tpu.memory_space<vmem>>, %arg4: memref<8x16xbf16, #tpu.memory_space<vmem>>) attributes {dimension_semantics = [#tpu.dimension_semantics<parallel>], iteration_bounds = array<i64: 1>, scalar_prefetch = 0 : i64, scratch_operands = 0 : i64, tpu.core_type = #tpu.core_type<tc>, window_params = [{transform_indices = @transform_0, window_bounds = array<i64: 8, 72>}, {pipeline_mode = #tpu.pipeline_mode<synchronous>, transform_indices = @transform_1, window_bounds = array<i64: 72, 16>}, {pipeline_mode = #tpu.pipeline_mode<synchronous>, transform_indices = @transform_2, window_bounds = array<i64: 1, 16>}, {transform_indices = @transform_3, window_bounds = array<i64: 8, 16>}]} {
    %c0 = arith.constant 0 : index
    %c0_0 = arith.constant 0 : index
    %0 = vector.load %arg1[%c0, %c0_0] : memref<8x72xbf16, #tpu.memory_space<vmem>>, vector<8x72xbf16>
    %c0_1 = arith.constant 0 : index
    %c0_2 = arith.constant 0 : index
    %1 = vector.load %arg2[%c0_1, %c0_2] : memref<72x16xbf16, #tpu.memory_space<vmem>>, vector<72x16xbf16>
    %cst = arith.constant dense<0.000000e+00> : vector<8x16xf32>
    %2 = tpu.matmul %0, %1, %cst {dimension_numbers = #tpu.dot_dimension_numbers<[1], [0], [0], [1], [0, 0, 1, 1], [], []>} : vector<8x72xbf16>, vector<72x16xbf16>, vector<8x16xf32> -> vector<8x16xf32>
    %c0_3 = arith.constant 0 : index
    %c0_4 = arith.constant 0 : index
    %3 = vector.load %arg3[%c0_3, %c0_4] : memref<1x16xf32, #tpu.memory_space<vmem>>, vector<1x16xf32>
    %4 = vector.broadcast %3 : vector<1x16xf32> to vector<8x16xf32>
    %5 = arith.addf %2, %4 : vector<8x16xf32>
    %cst_5 = arith.constant 0.000000e+00 : f32
    %6 = vector.broadcast %cst_5 : f32 to vector<8x16xf32>
    %7 = arith.maximumf %5, %6 : vector<8x16xf32>
    %8 = arith.truncf %7 : vector<8x16xf32> to vector<8x16xbf16>
    %c0_6 = arith.constant 0 : index
    %c0_7 = arith.constant 0 : index
    %9 = vector.load %arg4[%c0_6, %c0_7] : memref<8x16xbf16, #tpu.memory_space<vmem>>, vector<8x16xbf16>
    tpu.vector_store %arg4[%c0_6, %c0_7], %8 {strides = array<i32>} : memref<8x16xbf16, #tpu.memory_space<vmem>>, vector<8x16xbf16>,
    return
  }
  func.func @transform_0(%arg0: i32) -> (i32, i32) {
    %c0_i32 = arith.constant 0 : i32
    %c0_i32_0 = arith.constant 0 : i32
    return %arg0, %c0_i32 : i32, i32
  }
  func.func @transform_1(%arg0: i32) -> (i32, i32) {
    %c0_i32 = arith.constant 0 : i32
    %c0_i32_0 = arith.constant 0 : i32
    %c0_i32_1 = arith.constant 0 : i32
    return %c0_i32, %c0_i32_0 : i32, i32
  }
  func.func @transform_2(%arg0: i32) -> (i32, i32) {
    %c0_i32 = arith.constant 0 : i32
    %c0_i32_0 = arith.constant 0 : i32
    %c0_i32_1 = arith.constant 0 : i32
    return %c0_i32, %c0_i32_0 : i32, i32
  }
  func.func @transform_3(%arg0: i32) -> (i32, i32) {
    %c0_i32 = arith.constant 0 : i32
    %c0_i32_0 = arith.constant 0 : i32
    return %arg0, %c0_i32 : i32, i32
  }
}

module attributes {stable_mosaic.version = 11 : i64} {
  func.func @_matmul_bias_act_kernel(%arg0: i32, %arg1: memref<2x144xbf16, #tpu.memory_space<vmem>>, %arg2: memref<144x32xbf16, #tpu.memory_space<vmem>>, %arg3: memref<1x32xf32, #tpu.memory_space<vmem>>, %arg4: memref<2x32xbf16, #tpu.memory_space<vmem>>) attributes {dimension_semantics = [#tpu.dimension_semantics<parallel>], iteration_bounds = array<i64: 1>, scalar_prefetch = 0 : i64, scratch_operands = 0 : i64, tpu.core_type = #tpu.core_type<tc>, window_params = [{transform_indices = @transform_0, window_bounds = array<i64: 2, 144>}, {pipeline_mode = #tpu.pipeline_mode<synchronous>, transform_indices = @transform_1, window_bounds = array<i64: 144, 32>}, {pipeline_mode = #tpu.pipeline_mode<synchronous>, transform_indices = @transform_2, window_bounds = array<i64: 1, 32>}, {transform_indices = @transform_3, window_bounds = array<i64: 2, 32>}]} {
    %c0 = arith.constant 0 : index
    %c0_0 = arith.constant 0 : index
    %0 = vector.load %arg1[%c0, %c0_0] : memref<2x144xbf16, #tpu.memory_space<vmem>>, vector<2x144xbf16>
    %c0_1 = arith.constant 0 : index
    %c0_2 = arith.constant 0 : index
    %1 = vector.load %arg2[%c0_1, %c0_2] : memref<144x32xbf16, #tpu.memory_space<vmem>>, vector<144x32xbf16>
    %cst = arith.constant dense<0.000000e+00> : vector<2x32xf32>
    %2 = tpu.matmul %0, %1, %cst {dimension_numbers = #tpu.dot_dimension_numbers<[1], [0], [0], [1], [0, 0, 1, 1], [], []>} : vector<2x144xbf16>, vector<144x32xbf16>, vector<2x32xf32> -> vector<2x32xf32>
    %c0_3 = arith.constant 0 : index
    %c0_4 = arith.constant 0 : index
    %3 = vector.load %arg3[%c0_3, %c0_4] : memref<1x32xf32, #tpu.memory_space<vmem>>, vector<1x32xf32>
    %4 = vector.broadcast %3 : vector<1x32xf32> to vector<2x32xf32>
    %5 = arith.addf %2, %4 : vector<2x32xf32>
    %cst_5 = arith.constant 0.000000e+00 : f32
    %6 = vector.broadcast %cst_5 : f32 to vector<2x32xf32>
    %7 = arith.maximumf %5, %6 : vector<2x32xf32>
    %8 = arith.truncf %7 : vector<2x32xf32> to vector<2x32xbf16>
    %c0_6 = arith.constant 0 : index
    %c0_7 = arith.constant 0 : index
    %9 = vector.load %arg4[%c0_6, %c0_7] : memref<2x32xbf16, #tpu.memory_space<vmem>>, vector<2x32xbf16>
    tpu.vector_store %arg4[%c0_6, %c0_7], %8 {strides = array<i32>} : memref<2x32xbf16, #tpu.memory_space<vmem>>, vector<2x32xbf16>,
    return
  }
  func.func @transform_0(%arg0: i32) -> (i32, i32) {
    %c0_i32 = arith.constant 0 : i32
    %c0_i32_0 = arith.constant 0 : i32
    return %arg0, %c0_i32 : i32, i32
  }
  func.func @transform_1(%arg0: i32) -> (i32, i32) {
    %c0_i32 = arith.constant 0 : i32
    %c0_i32_0 = arith.constant 0 : i32
    %c0_i32_1 = arith.constant 0 : i32
    return %c0_i32, %c0_i32_0 : i32, i32
  }
  func.func @transform_2(%arg0: i32) -> (i32, i32) {
    %c0_i32 = arith.constant 0 : i32
    %c0_i32_0 = arith.constant 0 : i32
    %c0_i32_1 = arith.constant 0 : i32
    return %c0_i32, %c0_i32_0 : i32, i32
  }
  func.func @transform_3(%arg0: i32) -> (i32, i32) {
    %c0_i32 = arith.constant 0 : i32
    %c0_i32_0 = arith.constant 0 : i32
    return %arg0, %c0_i32 : i32, i32
  }
}

module attributes {stable_mosaic.version = 11 : i64} {
  func.func @_ecp_fused_kernel(%arg0: memref<32x8xbf16, #tpu.memory_space<vmem>>, %arg1: memref<8x32xbf16, #tpu.memory_space<vmem>>, %arg2: memref<1x32xf32, #tpu.memory_space<vmem>>, %arg3: memref<8x16xbf16, #tpu.memory_space<vmem>>, %arg4: memref<16x64xbf16, #tpu.memory_space<vmem>>, %arg5: memref<1x64xf32, #tpu.memory_space<vmem>>, %arg6: memref<2x32xbf16, #tpu.memory_space<vmem>>, %arg7: memref<32x128xbf16, #tpu.memory_space<vmem>>, %arg8: memref<1x128xf32, #tpu.memory_space<vmem>>, %arg9: memref<8x32xbf16, #tpu.memory_space<vmem>>, %arg10: memref<8x64xbf16, #tpu.memory_space<vmem>>, %arg11: memref<2x128xbf16, #tpu.memory_space<vmem>>) attributes {dimension_semantics = [], scalar_prefetch = 0 : i64, scratch_operands = 0 : i64, tpu.core_type = #tpu.core_type<tc>} {
    %c0 = arith.constant 0 : index
    %c0_0 = arith.constant 0 : index
    %0 = vector.load %arg0[%c0, %c0_0] : memref<32x8xbf16, #tpu.memory_space<vmem>>, vector<32x8xbf16>
    %c0_1 = arith.constant 0 : index
    %c0_2 = arith.constant 0 : index
    %1 = vector.load %arg1[%c0_1, %c0_2] : memref<8x32xbf16, #tpu.memory_space<vmem>>, vector<8x32xbf16>
    %cst = arith.constant dense<0.000000e+00> : vector<32x32xf32>
    %2 = tpu.matmul %0, %1, %cst {dimension_numbers = #tpu.dot_dimension_numbers<[1], [0], [0], [1], [0, 0, 1, 1], [], []>} : vector<32x8xbf16>, vector<8x32xbf16>, vector<32x32xf32> -> vector<32x32xf32>
    %c0_3 = arith.constant 0 : index
    %c0_4 = arith.constant 0 : index
    %3 = vector.load %arg2[%c0_3, %c0_4] : memref<1x32xf32, #tpu.memory_space<vmem>>, vector<1x32xf32>
    %4 = vector.broadcast %3 : vector<1x32xf32> to vector<32x32xf32>
    %5 = arith.addf %2, %4 : vector<32x32xf32>
    %cst_5 = arith.constant 0.000000e+00 : f32
    %6 = vector.broadcast %cst_5 : f32 to vector<32x32xf32>
    %7 = arith.maximumf %5, %6 : vector<32x32xf32>
    %8 = vector.extract_strided_slice %7 {offsets = [0, 0], sizes = [8, 32], strides = [1, 1]} : vector<32x32xf32> to vector<8x32xf32>
    %9 = vector.extract_strided_slice %7 {offsets = [8, 0], sizes = [8, 32], strides = [1, 1]} : vector<32x32xf32> to vector<8x32xf32>
    %10 = arith.addf %8, %9 : vector<8x32xf32>
    %11 = vector.extract_strided_slice %7 {offsets = [16, 0], sizes = [8, 32], strides = [1, 1]} : vector<32x32xf32> to vector<8x32xf32>
    %12 = arith.addf %10, %11 : vector<8x32xf32>
    %13 = vector.extract_strided_slice %7 {offsets = [24, 0], sizes = [8, 32], strides = [1, 1]} : vector<32x32xf32> to vector<8x32xf32>
    %14 = arith.addf %12, %13 : vector<8x32xf32>
    %cst_6 = arith.constant 2.500000e-01 : f32
    %15 = vector.broadcast %cst_6 : f32 to vector<8x32xf32>
    %16 = arith.mulf %14, %15 : vector<8x32xf32>
    %17 = arith.truncf %16 : vector<8x32xf32> to vector<8x32xbf16>
    %c0_7 = arith.constant 0 : index
    %c0_8 = arith.constant 0 : index
    %18 = vector.load %arg9[%c0_7, %c0_8] : memref<8x32xbf16, #tpu.memory_space<vmem>>, vector<8x32xbf16>
    tpu.vector_store %arg9[%c0_7, %c0_8], %17 {strides = array<i32>} : memref<8x32xbf16, #tpu.memory_space<vmem>>, vector<8x32xbf16>,
    %c0_9 = arith.constant 0 : index
    %c0_10 = arith.constant 0 : index
    %19 = vector.load %arg3[%c0_9, %c0_10] : memref<8x16xbf16, #tpu.memory_space<vmem>>, vector<8x16xbf16>
    %c0_11 = arith.constant 0 : index
    %c0_12 = arith.constant 0 : index
    %20 = vector.load %arg4[%c0_11, %c0_12] : memref<16x64xbf16, #tpu.memory_space<vmem>>, vector<16x64xbf16>
    %cst_13 = arith.constant dense<0.000000e+00> : vector<8x64xf32>
    %21 = tpu.matmul %19, %20, %cst_13 {dimension_numbers = #tpu.dot_dimension_numbers<[1], [0], [0], [1], [0, 0, 1, 1], [], []>} : vector<8x16xbf16>, vector<16x64xbf16>, vector<8x64xf32> -> vector<8x64xf32>
    %c0_14 = arith.constant 0 : index
    %c0_15 = arith.constant 0 : index
    %22 = vector.load %arg5[%c0_14, %c0_15] : memref<1x64xf32, #tpu.memory_space<vmem>>, vector<1x64xf32>
    %23 = vector.broadcast %22 : vector<1x64xf32> to vector<8x64xf32>
    %24 = arith.addf %21, %23 : vector<8x64xf32>
    %cst_16 = arith.constant 0.000000e+00 : f32
    %25 = vector.broadcast %cst_16 : f32 to vector<8x64xf32>
    %26 = arith.maximumf %24, %25 : vector<8x64xf32>
    %27 = arith.truncf %26 : vector<8x64xf32> to vector<8x64xbf16>
    %c0_17 = arith.constant 0 : index
    %c0_18 = arith.constant 0 : index
    %28 = vector.load %arg10[%c0_17, %c0_18] : memref<8x64xbf16, #tpu.memory_space<vmem>>, vector<8x64xbf16>
    tpu.vector_store %arg10[%c0_17, %c0_18], %27 {strides = array<i32>} : memref<8x64xbf16, #tpu.memory_space<vmem>>, vector<8x64xbf16>,
    %c0_19 = arith.constant 0 : index
    %c0_20 = arith.constant 0 : index
    %29 = vector.load %arg6[%c0_19, %c0_20] : memref<2x32xbf16, #tpu.memory_space<vmem>>, vector<2x32xbf16>
    %c0_21 = arith.constant 0 : index
    %c0_22 = arith.constant 0 : index
    %30 = vector.load %arg7[%c0_21, %c0_22] : memref<32x128xbf16, #tpu.memory_space<vmem>>, vector<32x128xbf16>
    %cst_23 = arith.constant dense<0.000000e+00> : vector<2x128xf32>
    %31 = tpu.matmul %29, %30, %cst_23 {dimension_numbers = #tpu.dot_dimension_numbers<[1], [0], [0], [1], [0, 0, 1, 1], [], []>} : vector<2x32xbf16>, vector<32x128xbf16>, vector<2x128xf32> -> vector<2x128xf32>
    %c0_24 = arith.constant 0 : index
    %c0_25 = arith.constant 0 : index
    %32 = vector.load %arg8[%c0_24, %c0_25] : memref<1x128xf32, #tpu.memory_space<vmem>>, vector<1x128xf32>
    %33 = vector.broadcast %32 : vector<1x128xf32> to vector<2x128xf32>
    %34 = arith.addf %31, %33 : vector<2x128xf32>
    %cst_26 = arith.constant 0.000000e+00 : f32
    %35 = vector.broadcast %cst_26 : f32 to vector<2x128xf32>
    %36 = arith.maximumf %34, %35 : vector<2x128xf32>
    %37 = arith.truncf %36 : vector<2x128xf32> to vector<2x128xbf16>
    %c0_27 = arith.constant 0 : index
    %c0_28 = arith.constant 0 : index
    %38 = vector.load %arg11[%c0_27, %c0_28] : memref<2x128xbf16, #tpu.memory_space<vmem>>, vector<2x128xbf16>
    tpu.vector_store %arg11[%c0_27, %c0_28], %37 {strides = array<i32>} : memref<2x128xbf16, #tpu.memory_space<vmem>>, vector<2x128xbf16>,
    return
  }
}

module attributes {stable_mosaic.version = 11 : i64} {
  func.func @_heads_kernel(%arg0: memref<2x256xbf16, #tpu.memory_space<vmem>>, %arg1: memref<2x256xbf16, #tpu.memory_space<vmem>>, %arg2: memref<256x128xbf16, #tpu.memory_space<vmem>>, %arg3: memref<1x128xf32, #tpu.memory_space<vmem>>, %arg4: memref<256x384xbf16, #tpu.memory_space<vmem>>, %arg5: memref<1x384xf32, #tpu.memory_space<vmem>>, %arg6: memref<2x512xf32, #tpu.memory_space<vmem>>) attributes {dimension_semantics = [], scalar_prefetch = 0 : i64, scratch_operands = 0 : i64, tpu.core_type = #tpu.core_type<tc>} {
    %c0 = arith.constant 0 : index
    %c0_0 = arith.constant 0 : index
    %0 = vector.load %arg0[%c0, %c0_0] : memref<2x256xbf16, #tpu.memory_space<vmem>>, vector<2x256xbf16>
    %c0_1 = arith.constant 0 : index
    %c0_2 = arith.constant 0 : index
    %1 = vector.load %arg2[%c0_1, %c0_2] : memref<256x128xbf16, #tpu.memory_space<vmem>>, vector<256x128xbf16>
    %cst = arith.constant dense<0.000000e+00> : vector<2x128xf32>
    %2 = tpu.matmul %0, %1, %cst {dimension_numbers = #tpu.dot_dimension_numbers<[1], [0], [0], [1], [0, 0, 1, 1], [], []>} : vector<2x256xbf16>, vector<256x128xbf16>, vector<2x128xf32> -> vector<2x128xf32>
    %c0_3 = arith.constant 0 : index
    %c0_4 = arith.constant 0 : index
    %3 = vector.load %arg3[%c0_3, %c0_4] : memref<1x128xf32, #tpu.memory_space<vmem>>, vector<1x128xf32>
    %4 = vector.broadcast %3 : vector<1x128xf32> to vector<2x128xf32>
    %5 = arith.addf %2, %4 : vector<2x128xf32>
    %c0_5 = arith.constant 0 : index
    %c0_6 = arith.constant 0 : index
    %6 = vector.load %arg1[%c0_5, %c0_6] : memref<2x256xbf16, #tpu.memory_space<vmem>>, vector<2x256xbf16>
    %c0_7 = arith.constant 0 : index
    %c0_8 = arith.constant 0 : index
    %7 = vector.load %arg4[%c0_7, %c0_8] : memref<256x384xbf16, #tpu.memory_space<vmem>>, vector<256x384xbf16>
    %cst_9 = arith.constant dense<0.000000e+00> : vector<2x384xf32>
    %8 = tpu.matmul %6, %7, %cst_9 {dimension_numbers = #tpu.dot_dimension_numbers<[1], [0], [0], [1], [0, 0, 1, 1], [], []>} : vector<2x256xbf16>, vector<256x384xbf16>, vector<2x384xf32> -> vector<2x384xf32>
    %c0_10 = arith.constant 0 : index
    %c0_11 = arith.constant 0 : index
    %9 = vector.load %arg5[%c0_10, %c0_11] : memref<1x384xf32, #tpu.memory_space<vmem>>, vector<1x384xf32>
    %10 = vector.broadcast %9 : vector<1x384xf32> to vector<2x384xf32>
    %11 = arith.addf %8, %10 : vector<2x384xf32>
    %12 = vector.extract_strided_slice %11 {offsets = [0, 0], sizes = [2, 128], strides = [1, 1]} : vector<2x384xf32> to vector<2x128xf32>
    %cst_12 = arith.constant dense<0xFF800000> : vector<2xf32>
    %13 = vector.multi_reduction <maximumf>, %12, %cst_12 [1] : vector<2x128xf32> to vector<2xf32>
    %14 = vector.shape_cast %13 : vector<2xf32> to vector<2x1xf32>
    %15 = vector.broadcast %14 : vector<2x1xf32> to vector<2x128xf32>
    %16 = arith.subf %12, %15 : vector<2x128xf32>
    %17 = math.exp %16 : vector<2x128xf32>
    %cst_13 = arith.constant dense<0.000000e+00> : vector<2xf32>
    %18 = vector.multi_reduction <add>, %17, %cst_13 [1] : vector<2x128xf32> to vector<2xf32>
    %19 = vector.shape_cast %18 : vector<2xf32> to vector<2x1xf32>
    %20 = vector.broadcast %19 : vector<2x1xf32> to vector<2x128xf32>
    %21 = arith.divf %17, %20 : vector<2x128xf32>
    %22 = vector.extract_strided_slice %11 {offsets = [0, 128], sizes = [2, 128], strides = [1, 1]} : vector<2x384xf32> to vector<2x128xf32>
    %cst_14 = arith.constant dense<0xFF800000> : vector<2xf32>
    %23 = vector.multi_reduction <maximumf>, %22, %cst_14 [1] : vector<2x128xf32> to vector<2xf32>
    %24 = vector.shape_cast %23 : vector<2xf32> to vector<2x1xf32>
    %25 = vector.broadcast %24 : vector<2x1xf32> to vector<2x128xf32>
    %26 = arith.subf %22, %25 : vector<2x128xf32>
    %27 = math.exp %26 : vector<2x128xf32>
    %cst_15 = arith.constant dense<0.000000e+00> : vector<2xf32>
    %28 = vector.multi_reduction <add>, %27, %cst_15 [1] : vector<2x128xf32> to vector<2xf32>
    %29 = vector.shape_cast %28 : vector<2xf32> to vector<2x1xf32>
    %30 = vector.broadcast %29 : vector<2x1xf32> to vector<2x128xf32>
    %31 = arith.divf %27, %30 : vector<2x128xf32>
    %32 = vector.extract_strided_slice %11 {offsets = [0, 256], sizes = [2, 128], strides = [1, 1]} : vector<2x384xf32> to vector<2x128xf32>
    %cst_16 = arith.constant dense<0xFF800000> : vector<2xf32>
    %33 = vector.multi_reduction <maximumf>, %32, %cst_16 [1] : vector<2x128xf32> to vector<2xf32>
    %34 = vector.shape_cast %33 : vector<2xf32> to vector<2x1xf32>
    %35 = vector.broadcast %34 : vector<2x1xf32> to vector<2x128xf32>
    %36 = arith.subf %32, %35 : vector<2x128xf32>
    %37 = math.exp %36 : vector<2x128xf32>
    %cst_17 = arith.constant dense<0.000000e+00> : vector<2xf32>
    %38 = vector.multi_reduction <add>, %37, %cst_17 [1] : vector<2x128xf32> to vector<2xf32>
    %39 = vector.shape_cast %38 : vector<2xf32> to vector<2x1xf32>
    %40 = vector.broadcast %39 : vector<2x1xf32> to vector<2x128xf32>
    %41 = arith.divf %37, %40 : vector<2x128xf32>
    %42 = tpu.concatenate %5, %21, %31, %41 in 1 : vector<2x128xf32>, vector<2x128xf32>, vector<2x128xf32>, vector<2x128xf32> -> vector<2x512xf32>
    %c0_18 = arith.constant 0 : index
    %c0_19 = arith.constant 0 : index
    %43 = vector.load %arg6[%c0_18, %c0_19] : memref<2x512xf32, #tpu.memory_space<vmem>>, vector<2x512xf32>
    tpu.vector_store %arg6[%c0_18, %c0_19], %42 {strides = array<i32>} : memref<2x512xf32, #tpu.memory_space<vmem>>, vector<2x512xf32>,
    return
  }
}

</mosaic_0001>

<llo_original>
// kernel: _lambda_.7
$region0: #{_lambda_.7}
  #allocation0 [shape = 'u32[]', space=smem, size = 0x4, offset = 0x4, fixed_abs, tag = 'smem constant byte address 0x4 - core index']
  #allocation1 [shape = 'u32[144,128]{1,0:T(1,128)}', space=vmem, size = 0x12000, scoped, tag = 'internal scratch']
  %s0 = inlined_call_operand.vmem [shape: bf16[512,27], index: 0, kind: input, shape index: {}]
  %s1 = inlined_call_operand.vmem [shape: bf16[27,4], index: 1, kind: input, shape index: {}]
  %s2 = inlined_call_operand.vmem [shape: f32[1,4], index: 2, kind: input, shape index: {}]
  %s3 = inlined_call_operand.vmem [shape: bf16[512,4], index: 3, kind: output, shape index: {}]
  %s4 = sld [smem:[#allocation0]]
  $region45: #{_lambda_.7} parent=0
    _
  %s6 = ssub.s32 1, %s4
  %s7 = scalar_select 0, %s6, %s4
  loop: start=0, step=1, limit=4
  $region2: #{_lambda_.7} parent=0 // loop_pre_header
    _
  $region3: #{_lambda_.7} parent=0 // loop_header
    %s9 = sphi 0, %s13
    %p10 = scmp.ge.s32.totalorder %s9, 4
    %s19 = sphi 0, %s21
    %s22 = sphi 0, %s19
    %s23 = sphi 0, %s22
    %s39 = sphi 0, %s23
    %s43 = sphi 0, %s43
    %s45 = sphi 0, %s43
    %s46 = sphi 0, %s45
    %s60 = sphi 0, %s46
    %s64 = sphi 0, %s64
    %s66 = sphi 0, %s64
    %s67 = sphi 0, %s66
    %s81 = sphi 0, %s67
    %s87 = sphi 0, %s89
    %s90 = sphi 0, %s87
    %s91 = sphi 0, %s90
    %s107 = sphi 0, %s91
  $region4: #{_lambda_.7} parent=0 // loop_header_branch
    %12 = sbr.rel (%p10) target = $region8
  $region5: #{_lambda_.7} parent=0 // loop_body
    %s14 = ssub.s32 %s9, 1
    %s15 = ssub.s32 %s9, 2
    %s16 = sadd.s32 %s9, 1
    %s17 = ssub.s32 %s9, %s16
    %p18 = scmp.eq.s32.totalorder %s17, 0
    %s20 = sadd.s32 %s19, 1
    %s21 = scalar_select %p18, %s19, %s20
    %p24 = pneg %p18
    %p25 = scmp.eq.s32.totalorder %s9, 1
    %p26 = por %p24, %p25
    %p27 = scmp.ne.s32.totalorder %s19, %s22
    %p28 = scmp.eq.s32.totalorder %s9, 0
    %p29 = por %p27, %p28
    %p30 = scmp.ne.s32.totalorder %s19, %s22
    %p31 = scmp.eq.s32.totalorder %s14, 1
    %p32 = por %p30, %p31
    %p33 = scmp.ne.s32.totalorder %s22, %s23
    %p34 = scmp.eq.s32.totalorder %s14, 0
    %p35 = por %p33, %p34
    %p36 = scmp.ne.s32.totalorder %s22, %s23
    %p37 = scmp.eq.s32.totalorder %s15, 1
    %p38 = por %p36, %p37
    %p40 = scmp.ne.s32.totalorder %s23, %s39
    %p41 = scmp.eq.s32.totalorder %s15, 0
    %p42 = por %p40, %p41
    %s44 = sadd.s32 %s43, 1
    %p47 = scmp.eq.s32.totalorder %s9, 1
    %p48 = scmp.ne.s32.totalorder %s43, %s45
    %p49 = scmp.eq.s32.totalorder %s9, 0
    %p50 = por %p48, %p49
    %p51 = scmp.ne.s32.totalorder %s43, %s45
    %p52 = scmp.eq.s32.totalorder %s14, 1
    %p53 = por %p51, %p52
    %p54 = scmp.ne.s32.totalorder %s45, %s46
    %p55 = scmp.eq.s32.totalorder %s14, 0
    %p56 = por %p54, %p55
    %p57 = scmp.ne.s32.totalorder %s45, %s46
    %p58 = scmp.eq.s32.totalorder %s15, 1
    %p59 = por %p57, %p58
    %p61 = scmp.ne.s32.totalorder %s46, %s60
    %p62 = scmp.eq.s32.totalorder %s15, 0
    %p63 = por %p61, %p62
    %s65 = sadd.s32 %s64, 1
    %p68 = scmp.eq.s32.totalorder %s9, 1
    %p69 = scmp.ne.s32.totalorder %s64, %s66
    %p70 = scmp.eq.s32.totalorder %s9, 0
    %p71 = por %p69, %p70
    %p72 = scmp.ne.s32.totalorder %s64, %s66
    %p73 = scmp.eq.s32.totalorder %s14, 1
    %p74 = por %p72, %p73
    %p75 = scmp.ne.s32.totalorder %s66, %s67
    %p76 = scmp.eq.s32.totalorder %s14, 0
    %p77 = por %p75, %p76
    %p78 = scmp.ne.s32.totalorder %s66, %s67
    %p79 = scmp.eq.s32.totalorder %s15, 1
    %p80 = por %p78, %p79
    %p82 = scmp.ne.s32.totalorder %s67, %s81
    %p83 = scmp.eq.s32.totalorder %s15, 0
    %p84 = por %p82, %p83
    %s85 = ssub.s32 %s9, %s16
    %p86 = scmp.eq.s32.totalorder %s85, 0
    %s88 = sadd.s32 %s87, 1
    %s89 = scalar_select %p86, %s87, %s88
    %p92 = pneg %p86
    %p93 = scmp.eq.s32.totalorder %s9, 1
    %p94 = por %p92, %p93
    %p95 = scmp.ne.s32.totalorder %s87, %s90
    %p96 = scmp.eq.s32.totalorder %s9, 0
    %p97 = por %p95, %p96
    %p98 = scmp.ne.s32.totalorder %s87, %s90
    %p99 = scmp.eq.s32.totalorder %s14, 1
    %p100 = por %p98, %p99
    %p101 = scmp.ne.s32.totalorder %s90, %s91
    %p102 = scmp.eq.s32.totalorder %s14, 0
    %p103 = por %p101, %p102
    %p104 = scmp.ne.s32.totalorder %s90, %s91
    %p105 = scmp.eq.s32.totalorder %s15, 1
    %p106 = por %p104, %p105
    %p108 = scmp.ne.s32.totalorder %s91, %s107
    %p109 = scmp.eq.s32.totalorder %s15, 0
    %p110 = por %p108, %p109
    %p111 = scmp.le.s32.totalorder 1, %s9
    %p112 = scmp.lt.s32.totalorder %s9, 3
    %p113 = pnand %p111, %p112
    %p114 = pneg %p113
    // Predicated region
    $region9: #{_lambda_.7} parent=5 // pred_check
      _
    $region10: #{_lambda_.7} parent=5 // pred_check_branch
      %116 = sbr.rel (%p113) target = $region12
    $region11: #{_lambda_.7} parent=5 // pred_region
      %s117 = ssub.s32 %s9, 1
      // Predicated region
      $region13: #{_lambda_.7} parent=11 // pred_check
        %p118 = pneg %p56
      $region14: #{_lambda_.7} parent=11 // pred_check_branch
        %120 = sbr.rel (%p118) target = $region16
      $region15: #{_lambda_.7} parent=11 // pred_region
        _
      $region16: #{_lambda_.7} parent=11 // pred_fallthru
        _
      // Predicated region
      $region17: #{_lambda_.7} parent=11 // pred_check
        %p121 = pneg %p77
      $region18: #{_lambda_.7} parent=11 // pred_check_branch
        %123 = sbr.rel (%p121) target = $region20
      $region19: #{_lambda_.7} parent=11 // pred_region
        _
      $region20: #{_lambda_.7} parent=11 // pred_fallthru
        _
    $region12: #{_lambda_.7} parent=5 // pred_fallthru
      _
    %p124 = scmp.lt.s32.totalorder %s9, 2
    // Predicated region
    $region21: #{_lambda_.7} parent=5 // pred_check
      %p125 = pneg %p124
    $region22: #{_lambda_.7} parent=5 // pred_check_branch
      %127 = sbr.rel (%p125) target = $region24
    $region23: #{_lambda_.7} parent=5 // pred_region
      // Predicated region
      $region25: #{_lambda_.7} parent=23 // pred_check
        %p128 = pneg %p29
      $region26: #{_lambda_.7} parent=23 // pred_check_branch
        %130 = sbr.rel (%p128) target = $region28
      $region27: #{_lambda_.7} parent=23 // pred_region
        %s131 = smul.u32 32, %s9
        %p132 = scmp.lt.s32.totalorder %s131, 63
        %s133 = scalar_select %p132, %s131, 63
        %s134 = smul.addr %s133, 4
        %s135 = scalar_lea.vmem %s0, %s134
        %s136 = smul.u32 32, %s9
      $region28: #{_lambda_.7} parent=23 // pred_fallthru
        _
    $region24: #{_lambda_.7} parent=5 // pred_fallthru
      _
    %p137 = scmp.le.s32.totalorder 1, %s9
    %p138 = scmp.lt.s32.totalorder %s9, 3
    %p139 = pnand %p137, %p138
    %p140 = pneg %p139
    // Predicated region
    $region29: #{_lambda_.7} parent=5 // pred_check
      _
    $region30: #{_lambda_.7} parent=5 // pred_check_branch
      %142 = sbr.rel (%p139) target = $region32
    $region31: #{_lambda_.7} parent=5 // pred_region
      %s143 = ssub.s32 %s9, 1
      %s144 = smul.u32 32, %s14
      %p145 = scmp.lt.s32.totalorder %s144, 63
      %s146 = scalar_select %p145, %s144, 63
      %s147 = smul.addr %s146, 4
      %s148 = scalar_lea.vmem %s0, %s147
      %p149 = pneg %p35
      %p150 = pneg %p32
      %p151 = pneg %p56
      %p152 = pneg %p53
      %p153 = pneg %p77
      %p154 = pneg %p74
      %p155 = pneg %p103
      %p156 = pneg %p100
      %s157 = smul.u32 32, %s14
      %p158 = scmp.lt.s32.totalorder %s157, 63
      %s159 = scalar_select %p158, %s157, 63
      %s160 = smul.addr %s159, 4
      %s161 = scalar_lea.vmem %s3, %s160
      %s162 = smul.u32 32, %s14
      %p163 = scmp.lt.s32.totalorder %s162, 63
      %s164 = scalar_select %p163, %s162, 63
      %s165 = smul.addr %s164, 4
      %s166 = scalar_lea.vmem %s0, %s165
      %s167 = smul.u32 32, %s14
      %s168 = smul.u32 32, %s14
      %p169 = scmp.lt.s32.totalorder %s168, 63
      %s170 = scalar_select %p169, %s168, 63
      %s171 = smul.addr %s170, 4
      %s172 = scalar_lea.vmem %s3, %s171
      %s173 = smul.u32 32, %s14
      %v175 = vld [vmem:[%s166] sm:$0xf]
      %v176 = vld [vmem:[%s166 + $0x4] sm:$0xf]
      %v177 = vld [vmem:[%s166 + $0x8] sm:$0xf]
      %v178 = vld [vmem:[%s166 + $0xc] sm:$0xf]
      %v179 = vld [vmem:[%s166 + $0x10] sm:$0xf]
      %v180 = vld [vmem:[%s166 + $0x14] sm:$0xf]
      %v181 = vld [vmem:[%s166 + $0x18] sm:$0xf]
      %v182 = vld [vmem:[%s166 + $0x1c] sm:$0xf]
      %v183 = vld [vmem:[%s166 + $0x20] sm:$0xf]
      %v184 = vld [vmem:[%s166 + $0x24] sm:$0xf]
      %v185 = vld [vmem:[%s166 + $0x28] sm:$0xf]
      %v186 = vld [vmem:[%s166 + $0x2c] sm:$0xf]
      %v187 = vld [vmem:[%s166 + $0x30] sm:$0xf]
      %v188 = vld [vmem:[%s166 + $0x34] sm:$0xf]
      %v189 = vld [vmem:[%s166 + $0x38] sm:$0xf]
      %v190 = vld [vmem:[%s166 + $0x3c] sm:$0xf]
      %v191 = vld [vmem:[%s166 + $0x40] sm:$0xf]
      %v192 = vld [vmem:[%s166 + $0x44] sm:$0xf]
      %v193 = vld [vmem:[%s166 + $0x48] sm:$0xf]
      %v194 = vld [vmem:[%s166 + $0x4c] sm:$0xf]
      %v195 = vld [vmem:[%s166 + $0x50] sm:$0xf]
      %v196 = vld [vmem:[%s166 + $0x54] sm:$0xf]
      %v197 = vld [vmem:[%s166 + $0x58] sm:$0xf]
      %v198 = vld [vmem:[%s166 + $0x5c] sm:$0xf]
      %v199 = vld [vmem:[%s166 + $0x60] sm:$0xf]
      %v200 = vld [vmem:[%s166 + $0x64] sm:$0xf]
      %v201 = vld [vmem:[%s166 + $0x68] sm:$0xf]
      %v202 = vld [vmem:[%s166 + $0x6c] sm:$0xf]
      %v203 = vld [vmem:[%s166 + $0x70] sm:$0xf]
      %v204 = vld [vmem:[%s166 + $0x74] sm:$0xf]
      %v205 = vld [vmem:[%s166 + $0x78] sm:$0xf]
      %v206 = vld [vmem:[%s166 + $0x7c] sm:$0xf]
      %v207 = vld [vmem:[%s1] sm:$0xf]
      %v208 = vld [vmem:[%s1 + $0x4] sm:$0xf]
      %v209 = vld [vmem:[%s1 + $0x8] sm:$0xf]
      %v210 = vld [vmem:[%s1 + $0xc] sm:$0x3]
      %v211 = vld [vmem:[%s2] sm:$0x1]
      %v213 = vlaneseq
      %v214 = vshrl.u32 %v213, 7
      %v215 = vsub.s32 0, %v214
      %v216 = vrot.slane %v211, %v215
      %v250 = vunpack.c.l.b16 %v175
      %v251 = vunpack.c.l.b16 %v176
      %v252 = vunpack.c.l.b16 %v177
      %v253 = vunpack.c.l.b16 %v178
      %v254 = vunpack.c.l.b16 %v179
      %v255 = vunpack.c.l.b16 %v180
      %v256 = vunpack.c.l.b16 %v181
      %v257 = vunpack.c.l.b16 %v182
      %v258 = vunpack.c.l.b16 %v183
      %v259 = vunpack.c.l.b16 %v184
      %v260 = vunpack.c.l.b16 %v185
      %v261 = vunpack.c.l.b16 %v186
      %v262 = vunpack.c.l.b16 %v187
      %v263 = vunpack.c.l.b16 %v188
      %v264 = vunpack.c.l.b16 %v189
      %v265 = vunpack.c.l.b16 %v190
      %v266 = vunpack.c.l.b16 %v191
      %v267 = vunpack.c.l.b16 %v192
      %v268 = vunpack.c.l.b16 %v193
      %v269 = vunpack.c.l.b16 %v194
      %v270 = vunpack.c.l.b16 %v195
      %v271 = vunpack.c.l.b16 %v196
      %v272 = vunpack.c.l.b16 %v197
      %v273 = vunpack.c.l.b16 %v198
      %v274 = vunpack.c.l.b16 %v199
      %v275 = vunpack.c.l.b16 %v200
      %v276 = vunpack.c.l.b16 %v201
      %v277 = vunpack.c.l.b16 %v202
      %v278 = vunpack.c.l.b16 %v203
      %v279 = vunpack.c.l.b16 %v204
      %v280 = vunpack.c.l.b16 %v205
      %v281 = vunpack.c.l.b16 %v206
      %v282 = vpack.c.b16 %v251, %v250
      %v283 = vpack.c.b16 %v253, %v252
      %v284 = vpack.c.b16 %v255, %v254
      %v285 = vpack.c.b16 %v257, %v256
      %v286 = vpack.c.b16 %v259, %v258
      %v287 = vpack.c.b16 %v261, %v260
      %v288 = vpack.c.b16 %v263, %v262
      %v289 = vpack.c.b16 %v265, %v264
      %v290 = vpack.c.b16 %v267, %v266
      %v291 = vpack.c.b16 %v269, %v268
      %v292 = vpack.c.b16 %v271, %v270
      %v293 = vpack.c.b16 %v273, %v272
      %v294 = vpack.c.b16 %v275, %v274
      %v295 = vpack.c.b16 %v277, %v276
      %v296 = vpack.c.b16 %v279, %v278
      %v297 = vpack.c.b16 %v281, %v280
      %v302 = vunpack.c.l.b16 %v207
      %v303 = vunpack.c.l.b16 %v208
      %v304 = vunpack.c.l.b16 %v209
      %v305 = vunpack.c.l.b16 %v210
      %v306 = vpack.c.b16 %v303, %v302
      %v307 = vpack.c.b16 %v305, %v304
      %vm309 = vcmask 220160
      %v311 = vsel %vm309, %v282, 0
      %v314 = vsel %vm309, %v283, 0
      %v317 = vsel %vm309, %v284, 0
      %v320 = vsel %vm309, %v285, 0
      %v323 = vsel %vm309, %v286, 0
      %v326 = vsel %vm309, %v287, 0
      %v329 = vsel %vm309, %v288, 0
      %v332 = vsel %vm309, %v289, 0
      %v335 = vsel %vm309, %v290, 0
      %v338 = vsel %vm309, %v291, 0
      %v341 = vsel %vm309, %v292, 0
      %v344 = vsel %vm309, %v293, 0
      %v347 = vsel %vm309, %v294, 0
      %v350 = vsel %vm309, %v295, 0
      %v353 = vsel %vm309, %v296, 0
      %v356 = vsel %vm309, %v297, 0
      %vm358 = vcmask 1044480
      %vm359 = vcmask 1045504
      %v360 = vsel %vm358, 4294967295, 65535
      %v361 = vsel %vm359, %v360, 0
      %v363 = vand.u32 %v307, %v361
      %365 = vmatprep.subr.bf16.mxu0 0
      %366 = vmatpush1.bf16.msra.mxu0 %v306
      %367 = vmatprep.subr.bf16.mxu0 0
      %368 = vmatpush1.bf16.msra.mxu0 %v363
      %369 = vmatprep.subr.bf16.mxu0 0
      %370 = vmatpush1.bf16.msra.mxu0 0
      %371 = vmatprep.subr.bf16.mxu0 0
      %372 = vmatpush1.bf16.msra.mxu0 0
      %373 = vmatprep.subr.bf16.mxu0 0
      %374 = vmatpush1.bf16.msra.mxu0 0
      %375 = vmatprep.subr.bf16.mxu0 0
      %376 = vmatpush1.bf16.msra.mxu0 0
      %377 = vmatprep.subr.bf16.mxu0 0
      %378 = vmatpush1.bf16.msra.mxu0 0
      %379 = vmatprep.subr.bf16.mxu0 0
      %380 = vmatpush1.bf16.msra.mxu0 0
      %381 = vmatprep.subr.bf16.mxu0 0
      %382 = vmatpush1.bf16.msra.mxu0 0
      %383 = vmatprep.subr.bf16.mxu0 0
      %384 = vmatpush1.bf16.msra.mxu0 0
      %385 = vmatprep.subr.bf16.mxu0 0
      %386 = vmatpush1.bf16.msra.mxu0 0
      %387 = vmatprep.subr.bf16.mxu0 0
      %388 = vmatpush1.bf16.msra.mxu0 0
      %389 = vmatprep.subr.bf16.mxu0 0
      %390 = vmatpush1.bf16.msra.mxu0 0
      %391 = vmatprep.subr.bf16.mxu0 0
      %392 = vmatpush1.bf16.msra.mxu0 0
      %393 = vmatprep.subr.bf16.mxu0 0
      %394 = vmatpush1.bf16.msra.mxu0 0
      %395 = vmatprep.subr.bf16.mxu0 0
      %396 = vmatpush1.bf16.msra.mxu0 0
      %397 = vmatprep.mubr.bf16.mxu0 0
      %398 = vmatmul.mubr.bf16.gmra.mrb[0].mxu0 %v311
      %v399 = vpop.f32.mrb[0].mxu0
      %v400 = vadd.f32 %v216, %v399
      %v401 = vpop.f32.mrb[0].mxu0
      %v402 = vpop.f32.mrb[0].mxu0
      %v403 = vadd.f32 %v216, %v402
      %v404 = vpop.f32.mrb[0].mxu0
      %405 = vmatprep.mubr.bf16.mxu0 0
      %406 = vmatmul.mubr.bf16.gmra.mrb[0].mxu0 %v314
      %v407 = vpop.f32.mrb[0].mxu0
      %v408 = vadd.f32 %v216, %v407
      %v409 = vpop.f32.mrb[0].mxu0
      %v410 = vpop.f32.mrb[0].mxu0
      %v411 = vadd.f32 %v216, %v410
      %v412 = vpop.f32.mrb[0].mxu0
      %413 = vmatprep.mubr.bf16.mxu0 0
      %414 = vmatmul.mubr.bf16.gmra.mrb[0].mxu0 %v317
      %v415 = vpop.f32.mrb[0].mxu0
      %v416 = vadd.f32 %v216, %v415
      %v417 = vpop.f32.mrb[0].mxu0
      %v418 = vpop.f32.mrb[0].mxu0
      %v419 = vadd.f32 %v216, %v418
      %v420 = vpop.f32.mrb[0].mxu0
      %421 = vmatprep.mubr.bf16.mxu0 0
      %422 = vmatmul.mubr.bf16.gmra.mrb[0].mxu0 %v320
      %v423 = vpop.f32.mrb[0].mxu0
      %v424 = vadd.f32 %v216, %v423
      %v425 = vpop.f32.mrb[0].mxu0
      %v426 = vpop.f32.mrb[0].mxu0
      %v427 = vadd.f32 %v216, %v426
      %v428 = vpop.f32.mrb[0].mxu0
      %429 = vmatprep.mubr.bf16.mxu0 0
      %430 = vmatmul.mubr.bf16.gmra.mrb[0].mxu0 %v323
      %v431 = vpop.f32.mrb[0].mxu0
      %v432 = vadd.f32 %v216, %v431
      %v433 = vpop.f32.mrb[0].mxu0
      %v434 = vpop.f32.mrb[0].mxu0
      %v435 = vadd.f32 %v216, %v434
      %v436 = vpop.f32.mrb[0].mxu0
      %437 = vmatprep.mubr.bf16.mxu0 0
      %438 = vmatmul.mubr.bf16.gmra.mrb[0].mxu0 %v326
      %v439 = vpop.f32.mrb[0].mxu0
      %v440 = vadd.f32 %v216, %v439
      %v441 = vpop.f32.mrb[0].mxu0
      %v442 = vpop.f32.mrb[0].mxu0
      %v443 = vadd.f32 %v216, %v442
      %v444 = vpop.f32.mrb[0].mxu0
      %445 = vmatprep.mubr.bf16.mxu0 0
      %446 = vmatmul.mubr.bf16.gmra.mrb[0].mxu0 %v329
      %v447 = vpop.f32.mrb[0].mxu0
      %v448 = vadd.f32 %v216, %v447
      %v449 = vpop.f32.mrb[0].mxu0
      %v450 = vpop.f32.mrb[0].mxu0
      %v451 = vadd.f32 %v216, %v450
      %v452 = vpop.f32.mrb[0].mxu0
      %453 = vmatprep.mubr.bf16.mxu0 0
      %454 = vmatmul.mubr.bf16.gmra.mrb[0].mxu0 %v332
      %v455 = vpop.f32.mrb[0].mxu0
      %v456 = vadd.f32 %v216, %v455
      %v457 = vpop.f32.mrb[0].mxu0
      %v458 = vpop.f32.mrb[0].mxu0
      %v459 = vadd.f32 %v216, %v458
      %v460 = vpop.f32.mrb[0].mxu0
      %461 = vmatprep.mubr.bf16.mxu0 0
      %462 = vmatmul.mubr.bf16.gmra.mrb[0].mxu0 %v335
      %v463 = vpop.f32.mrb[0].mxu0
      %v464 = vadd.f32 %v216, %v463
      %v465 = vpop.f32.mrb[0].mxu0
      %v466 = vpop.f32.mrb[0].mxu0
      %v467 = vadd.f32 %v216, %v466
      %v468 = vpop.f32.mrb[0].mxu0
      %469 = vmatprep.mubr.bf16.mxu0 0
      %470 = vmatmul.mubr.bf16.gmra.mrb[0].mxu0 %v338
      %v471 = vpop.f32.mrb[0].mxu0
      %v472 = vadd.f32 %v216, %v471
      %v473 = vpop.f32.mrb[0].mxu0
      %v474 = vpop.f32.mrb[0].mxu0
      %v475 = vadd.f32 %v216, %v474
      %v476 = vpop.f32.mrb[0].mxu0
      %477 = vmatprep.mubr.bf16.mxu0 0
      %478 = vmatmul.mubr.bf16.gmra.mrb[0].mxu0 %v341
      %v479 = vpop.f32.mrb[0].mxu0
      %v480 = vadd.f32 %v216, %v479
      %v481 = vpop.f32.mrb[0].mxu0
      %v482 = vpop.f32.mrb[0].mxu0
      %v483 = vadd.f32 %v216, %v482
      %v484 = vpop.f32.mrb[0].mxu0
      %485 = vmatprep.mubr.bf16.mxu0 0
      %486 = vmatmul.mubr.bf16.gmra.mrb[0].mxu0 %v344
      %v487 = vpop.f32.mrb[0].mxu0
      %v488 = vadd.f32 %v216, %v487
      %v489 = vpop.f32.mrb[0].mxu0
      %v490 = vpop.f32.mrb[0].mxu0
      %v491 = vadd.f32 %v216, %v490
      %v492 = vpop.f32.mrb[0].mxu0
      %493 = vmatprep.mubr.bf16.mxu0 0
      %494 = vmatmul.mubr.bf16.gmra.mrb[0].mxu0 %v347
      %v495 = vpop.f32.mrb[0].mxu0
      %v496 = vadd.f32 %v216, %v495
      %v497 = vpop.f32.mrb[0].mxu0
      %v498 = vpop.f32.mrb[0].mxu0
      %v499 = vadd.f32 %v216, %v498
      %v500 = vpop.f32.mrb[0].mxu0
      %501 = vmatprep.mubr.bf16.mxu0 0
      %502 = vmatmul.mubr.bf16.gmra.mrb[0].mxu0 %v350
      %v503 = vpop.f32.mrb[0].mxu0
      %v504 = vadd.f32 %v216, %v503
      %v505 = vpop.f32.mrb[0].mxu0
      %v506 = vpop.f32.mrb[0].mxu0
      %v507 = vadd.f32 %v216, %v506
      %v508 = vpop.f32.mrb[0].mxu0
      %509 = vmatprep.mubr.bf16.mxu0 0
      %510 = vmatmul.mubr.bf16.gmra.mrb[0].mxu0 %v353
      %v511 = vpop.f32.mrb[0].mxu0
      %v512 = vadd.f32 %v216, %v511
      %v513 = vpop.f32.mrb[0].mxu0
      %v514 = vpop.f32.mrb[0].mxu0
      %v515 = vadd.f32 %v216, %v514
      %v516 = vpop.f32.mrb[0].mxu0
      %517 = vmatprep.mubr.bf16.mxu0 0
      %518 = vmatmul.mubr.bf16.gmra.mrb[0].mxu0 %v356
      %v519 = vpop.f32.mrb[0].mxu0
      %v520 = vadd.f32 %v216, %v519
      %v521 = vpop.f32.mrb[0].mxu0
      %v522 = vpop.f32.mrb[0].mxu0
      %v523 = vadd.f32 %v216, %v522
      %v524 = vpop.f32.mrb[0].mxu0
      %525 = vdwg.mxu0
      %v526 = vmax.f32 %v400, 0.0
      %v527 = vmax.f32 %v403, 0.0
      %v528 = vmax.f32 %v408, 0.0
      %v529 = vmax.f32 %v411, 0.0
      %v530 = vmax.f32 %v416, 0.0
      %v531 = vmax.f32 %v419, 0.0
      %v532 = vmax.f32 %v424, 0.0
      %v533 = vmax.f32 %v427, 0.0
      %v534 = vmax.f32 %v432, 0.0
      %v535 = vmax.f32 %v435, 0.0
      %v536 = vmax.f32 %v440, 0.0
      %v537 = vmax.f32 %v443, 0.0
      %v538 = vmax.f32 %v448, 0.0
      %v539 = vmax.f32 %v451, 0.0
      %v540 = vmax.f32 %v456, 0.0
      %v541 = vmax.f32 %v459, 0.0
      %v542 = vmax.f32 %v464, 0.0
      %v543 = vmax.f32 %v467, 0.0
      %v544 = vmax.f32 %v472, 0.0
      %v545 = vmax.f32 %v475, 0.0
      %v546 = vmax.f32 %v480, 0.0
      %v547 = vmax.f32 %v483, 0.0
      %v548 = vmax.f32 %v488, 0.0
      %v549 = vmax.f32 %v491, 0.0
      %v550 = vmax.f32 %v496, 0.0
      %v551 = vmax.f32 %v499, 0.0
      %v552 = vmax.f32 %v504, 0.0
      %v553 = vmax.f32 %v507, 0.0
      %v554 = vmax.f32 %v512, 0.0
      %v555 = vmax.f32 %v515, 0.0
      %v556 = vmax.f32 %v520, 0.0
      %v557 = vmax.f32 %v523, 0.0
      %v558 = vpack.c.bf16 %v527, %v526
      %v559 = vpack.c.bf16 %v529, %v528
      %v560 = vpack.c.bf16 %v531, %v530
      %v561 = vpack.c.bf16 %v533, %v532
      %v562 = vpack.c.bf16 %v535, %v534
      %v563 = vpack.c.bf16 %v537, %v536
      %v564 = vpack.c.bf16 %v539, %v538
      %v565 = vpack.c.bf16 %v541, %v540
      %v566 = vpack.c.bf16 %v543, %v542
      %v567 = vpack.c.bf16 %v545, %v544
      %v568 = vpack.c.bf16 %v547, %v546
      %v569 = vpack.c.bf16 %v549, %v548
      %v570 = vpack.c.bf16 %v551, %v550
      %v571 = vpack.c.bf16 %v553, %v552
      %v572 = vpack.c.bf16 %v555, %v554
      %v573 = vpack.c.bf16 %v557, %v556
      %v590 = vunpack.c.l.b16 %v558
      %v591 = vunpack.c.h.b16 %v558
      %v592 = vunpack.c.l.b16 %v559
      %v593 = vunpack.c.h.b16 %v559
      %v594 = vunpack.c.l.b16 %v560
      %v595 = vunpack.c.h.b16 %v560
      %v596 = vunpack.c.l.b16 %v561
      %v597 = vunpack.c.h.b16 %v561
      %v598 = vunpack.c.l.b16 %v562
      %v599 = vunpack.c.h.b16 %v562
      %v600 = vunpack.c.l.b16 %v563
      %v601 = vunpack.c.h.b16 %v563
      %v602 = vunpack.c.l.b16 %v564
      %v603 = vunpack.c.h.b16 %v564
      %v604 = vunpack.c.l.b16 %v565
      %v605 = vunpack.c.h.b16 %v565
      %v606 = vunpack.c.l.b16 %v566
      %v607 = vunpack.c.h.b16 %v566
      %v608 = vunpack.c.l.b16 %v567
      %v609 = vunpack.c.h.b16 %v567
      %v610 = vunpack.c.l.b16 %v568
      %v611 = vunpack.c.h.b16 %v568
      %v612 = vunpack.c.l.b16 %v569
      %v613 = vunpack.c.h.b16 %v569
      %v614 = vunpack.c.l.b16 %v570
      %v615 = vunpack.c.h.b16 %v570
      %v616 = vunpack.c.l.b16 %v571
      %v617 = vunpack.c.h.b16 %v571
      %v618 = vunpack.c.l.b16 %v572
      %v619 = vunpack.c.h.b16 %v572
      %v620 = vunpack.c.l.b16 %v573
      %v621 = vunpack.c.h.b16 %v573
      %v622 = vpack.c.b16 %v590, %v590
      %v623 = vpack.c.b16 %v591, %v591
      %v624 = vpack.c.b16 %v592, %v592
      %v625 = vpack.c.b16 %v593, %v593
      %v626 = vpack.c.b16 %v594, %v594
      %v627 = vpack.c.b16 %v595, %v595
      %v628 = vpack.c.b16 %v596, %v596
      %v629 = vpack.c.b16 %v597, %v597
      %v630 = vpack.c.b16 %v598, %v598
      %v631 = vpack.c.b16 %v599, %v599
      %v632 = vpack.c.b16 %v600, %v600
      %v633 = vpack.c.b16 %v601, %v601
      %v634 = vpack.c.b16 %v602, %v602
      %v635 = vpack.c.b16 %v603, %v603
      %v636 = vpack.c.b16 %v604, %v604
      %v637 = vpack.c.b16 %v605, %v605
      %v638 = vpack.c.b16 %v606, %v606
      %v639 = vpack.c.b16 %v607, %v607
      %v640 = vpack.c.b16 %v608, %v608
      %v641 = vpack.c.b16 %v609, %v609
      %v642 = vpack.c.b16 %v610, %v610
      %v643 = vpack.c.b16 %v611, %v611
      %v644 = vpack.c.b16 %v612, %v612
      %v645 = vpack.c.b16 %v613, %v613
      %v646 = vpack.c.b16 %v614, %v614
      %v647 = vpack.c.b16 %v615, %v615
      %v648 = vpack.c.b16 %v616, %v616
      %v649 = vpack.c.b16 %v617, %v617
      %v650 = vpack.c.b16 %v618, %v618
      %v651 = vpack.c.b16 %v619, %v619
      %v652 = vpack.c.b16 %v620, %v620
      %v653 = vpack.c.b16 %v621, %v621
      %vm686 = vcmask 27648
      %687 = vst.msk [vmem:[%s172] sm:$0xf] %vm686, %v622
      %688 = vst.msk [vmem:[%s172 + $0x4] sm:$0xf] %vm686, %v623
      %689 = vst.msk [vmem:[%s172 + $0x8] sm:$0xf] %vm686, %v624
      %690 = vst.msk [vmem:[%s172 + $0xc] sm:$0xf] %vm686, %v625
      %691 = vst.msk [vmem:[%s172 + $0x10] sm:$0xf] %vm686, %v626
      %692 = vst.msk [vmem:[%s172 + $0x14] sm:$0xf] %vm686, %v627
      %693 = vst.msk [vmem:[%s172 + $0x18] sm:$0xf] %vm686, %v628
      %694 = vst.msk [vmem:[%s172 + $0x1c] sm:$0xf] %vm686, %v629
      %695 = vst.msk [vmem:[%s172 + $0x20] sm:$0xf] %vm686, %v630
      %696 = vst.msk [vmem:[%s172 + $0x24] sm:$0xf] %vm686, %v631
      %697 = vst.msk [vmem:[%s172 + $0x28] sm:$0xf] %vm686, %v632
      %698 = vst.msk [vmem:[%s172 + $0x2c] sm:$0xf] %vm686, %v633
      %699 = vst.msk [vmem:[%s172 + $0x30] sm:$0xf] %vm686, %v634
      %700 = vst.msk [vmem:[%s172 + $0x34] sm:$0xf] %vm686, %v635
      %701 = vst.msk [vmem:[%s172 + $0x38] sm:$0xf] %vm686, %v636
      %702 = vst.msk [vmem:[%s172 + $0x3c] sm:$0xf] %vm686, %v637
      %703 = vst.msk [vmem:[%s172 + $0x40] sm:$0xf] %vm686, %v638
      %704 = vst.msk [vmem:[%s172 + $0x44] sm:$0xf] %vm686, %v639
      %705 = vst.msk [vmem:[%s172 + $0x48] sm:$0xf] %vm686, %v640
      %706 = vst.msk [vmem:[%s172 + $0x4c] sm:$0xf] %vm686, %v641
      %707 = vst.msk [vmem:[%s172 + $0x50] sm:$0xf] %vm686, %v642
      %708 = vst.msk [vmem:[%s172 + $0x54] sm:$0xf] %vm686, %v643
      %709 = vst.msk [vmem:[%s172 + $0x58] sm:$0xf] %vm686, %v644
      %710 = vst.msk [vmem:[%s172 + $0x5c] sm:$0xf] %vm686, %v645
      %711 = vst.msk [vmem:[%s172 + $0x60] sm:$0xf] %vm686, %v646
      %712 = vst.msk [vmem:[%s172 + $0x64] sm:$0xf] %vm686, %v647
      %713 = vst.msk [vmem:[%s172 + $0x68] sm:$0xf] %vm686, %v648
      %714 = vst.msk [vmem:[%s172 + $0x6c] sm:$0xf] %vm686, %v649
      %715 = vst.msk [vmem:[%s172 + $0x70] sm:$0xf] %vm686, %v650
      %716 = vst.msk [vmem:[%s172 + $0x74] sm:$0xf] %vm686, %v651
      %717 = vst.msk [vmem:[%s172 + $0x78] sm:$0xf] %vm686, %v652
      %718 = vst.msk [vmem:[%s172 + $0x7c] sm:$0xf] %vm686, %v653
      %s719 = smul.u32 32, %s14
      %p720 = scmp.lt.s32.totalorder %s719, 63
      %s721 = scalar_select %p720, %s719, 63
      %s722 = smul.addr %s721, 4
      %s723 = scalar_lea.vmem %s3, %s722
      // Predicated region
      $region33: #{_lambda_.7} parent=31 // pred_check
        %p724 = pneg %p100
      $region34: #{_lambda_.7} parent=31 // pred_check_branch
        %726 = sbr.rel (%p724) target = $region36
      $region35: #{_lambda_.7} parent=31 // pred_region
        %s727 = smul.u32 32, %s14
      $region36: #{_lambda_.7} parent=31 // pred_fallthru
        _
    $region32: #{_lambda_.7} parent=5 // pred_fallthru
      _
    %p728 = scmp.le.s32.totalorder 2, %s9
    // Predicated region
    $region37: #{_lambda_.7} parent=5 // pred_check
      %p729 = pneg %p728
    $region38: #{_lambda_.7} parent=5 // pred_check_branch
      %731 = sbr.rel (%p729) target = $region40
    $region39: #{_lambda_.7} parent=5 // pred_region
      %s732 = ssub.s32 %s9, 2
      // Predicated region
      $region41: #{_lambda_.7} parent=39 // pred_check
        %p733 = pneg %p106
      $region42: #{_lambda_.7} parent=39 // pred_check_branch
        %735 = sbr.rel (%p733) target = $region44
      $region43: #{_lambda_.7} parent=39 // pred_region
        %s736 = smul.u32 32, %s15
        %p737 = scmp.lt.s32.totalorder %s736, 63
        %s738 = scalar_select %p737, %s736, 63
        %s739 = smul.addr %s738, 4
        %s740 = scalar_lea.vmem %s3, %s739
      $region44: #{_lambda_.7} parent=39 // pred_fallthru
        _
    $region40: #{_lambda_.7} parent=5 // pred_fallthru
      _
  $region6: #{_lambda_.7} parent=0 // loop_footer
    %s13 = sadd.s32 1, %s9
  $region7: #{_lambda_.7} parent=0 // loop_footer_branch
    %8 = sbr.rel target = $region3
  $region8: #{_lambda_.7} parent=0 // loop_exit
    _

// kernel: _lambda_.8
$region0: #{_lambda_.8}
  #allocation0 [shape = 'u32[]', space=smem, size = 0x4, offset = 0x4, fixed_abs, tag = 'smem constant byte address 0x4 - core index']
  #allocation1 [shape = 'u32[144,128]{1,0:T(1,128)}', space=vmem, size = 0x12000, scoped, tag = 'internal scratch']
  %s0 = inlined_call_operand.vmem [shape: bf16[128,36], index: 0, kind: input, shape index: {}]
  %s1 = inlined_call_operand.vmem [shape: bf16[36,8], index: 1, kind: input, shape index: {}]
  %s2 = inlined_call_operand.vmem [shape: f32[1,8], index: 2, kind: input, shape index: {}]
  %s3 = inlined_call_operand.vmem [shape: bf16[128,8], index: 3, kind: output, shape index: {}]
  %s4 = sld [smem:[#allocation0]]
  $region22: #{_lambda_.8} parent=0
    _
  %s6 = ssub.s32 1, %s4
  %s7 = scalar_select 0, %s6, %s4
  // Predicated region
  $region2: #{_lambda_.8} parent=0 // pred_check
    _
  $region3: #{_lambda_.8} parent=0 // pred_check_branch
    %9 = sbr.rel (0) target = $region5
  $region4: #{_lambda_.8} parent=0 // pred_region
    _
  $region5: #{_lambda_.8} parent=0 // pred_fallthru
    _
  // Predicated region
  $region6: #{_lambda_.8} parent=0 // pred_check
    _
  $region7: #{_lambda_.8} parent=0 // pred_check_branch
    %11 = sbr.rel (0) target = $region9
  $region8: #{_lambda_.8} parent=0 // pred_region
    _
  $region9: #{_lambda_.8} parent=0 // pred_fallthru
    _
  // Predicated region
  $region10: #{_lambda_.8} parent=0 // pred_check
    _
  $region11: #{_lambda_.8} parent=0 // pred_check_branch
    %13 = sbr.rel (0) target = $region13
  $region12: #{_lambda_.8} parent=0 // pred_region
    _
  $region13: #{_lambda_.8} parent=0 // pred_fallthru
    _
  %v15 = vld [vmem:[%s0] sm:$0xf]
  %v16 = vld [vmem:[%s0 + $0x4] sm:$0xf]
  %v17 = vld [vmem:[%s0 + $0x8] sm:$0xf]
  %v18 = vld [vmem:[%s0 + $0xc] sm:$0xf]
  %v19 = vld [vmem:[%s0 + $0x10] sm:$0xf]
  %v20 = vld [vmem:[%s0 + $0x14] sm:$0xf]
  %v21 = vld [vmem:[%s0 + $0x18] sm:$0xf]
  %v22 = vld [vmem:[%s0 + $0x1c] sm:$0xf]
  %v23 = vld [vmem:[%s0 + $0x20] sm:$0xf]
  %v24 = vld [vmem:[%s0 + $0x24] sm:$0xf]
  %v25 = vld [vmem:[%s0 + $0x28] sm:$0xf]
  %v26 = vld [vmem:[%s0 + $0x2c] sm:$0xf]
  %v27 = vld [vmem:[%s0 + $0x30] sm:$0xf]
  %v28 = vld [vmem:[%s0 + $0x34] sm:$0xf]
  %v29 = vld [vmem:[%s0 + $0x38] sm:$0xf]
  %v30 = vld [vmem:[%s0 + $0x3c] sm:$0xf]
  %v31 = vld [vmem:[%s1] sm:$0xf]
  %v32 = vld [vmem:[%s1 + $0x4] sm:$0xf]
  %v33 = vld [vmem:[%s1 + $0x8] sm:$0xf]
  %v34 = vld [vmem:[%s1 + $0xc] sm:$0xf]
  %v35 = vld [vmem:[%s1 + $0x10] sm:$0x3]
  %v36 = vld [vmem:[%s2] sm:$0x1]
  %v38 = vlaneseq
  %v39 = vshrl.u32 %v38, 7
  %v40 = vsub.s32 0, %v39
  %v41 = vrot.slane %v36, %v40
  %v59 = vunpack.c.l.b16 %v15
  %v60 = vunpack.c.l.b16 %v16
  %v61 = vunpack.c.l.b16 %v17
  %v62 = vunpack.c.l.b16 %v18
  %v63 = vunpack.c.l.b16 %v19
  %v64 = vunpack.c.l.b16 %v20
  %v65 = vunpack.c.l.b16 %v21
  %v66 = vunpack.c.l.b16 %v22
  %v67 = vunpack.c.l.b16 %v23
  %v68 = vunpack.c.l.b16 %v24
  %v69 = vunpack.c.l.b16 %v25
  %v70 = vunpack.c.l.b16 %v26
  %v71 = vunpack.c.l.b16 %v27
  %v72 = vunpack.c.l.b16 %v28
  %v73 = vunpack.c.l.b16 %v29
  %v74 = vunpack.c.l.b16 %v30
  %v75 = vpack.c.b16 %v60, %v59
  %v76 = vpack.c.b16 %v62, %v61
  %v77 = vpack.c.b16 %v64, %v63
  %v78 = vpack.c.b16 %v66, %v65
  %v79 = vpack.c.b16 %v68, %v67
  %v80 = vpack.c.b16 %v70, %v69
  %v81 = vpack.c.b16 %v72, %v71
  %v82 = vpack.c.b16 %v74, %v73
  %v88 = vunpack.c.l.b16 %v31
  %v89 = vunpack.c.l.b16 %v32
  %v90 = vunpack.c.l.b16 %v33
  %v91 = vunpack.c.l.b16 %v34
  %v92 = vunpack.c.l.b16 %v35
  %v93 = vpack.c.b16 %v89, %v88
  %v94 = vpack.c.b16 %v91, %v90
  %v95 = vpack.c.b16 %v92, %v92
  %vm98 = vcmask 293888
  %v100 = vsel %vm98, %v75, 0
  %v103 = vsel %vm98, %v76, 0
  %v106 = vsel %vm98, %v77, 0
  %v109 = vsel %vm98, %v78, 0
  %v112 = vsel %vm98, %v79, 0
  %v115 = vsel %vm98, %v80, 0
  %v118 = vsel %vm98, %v81, 0
  %v121 = vsel %vm98, %v82, 0
  %vm123 = vcmask 1041408
  %v125 = vsel %vm123, %v95, 0
  %127 = vmatprep.subr.bf16.mxu0 0
  %128 = vmatpush1.bf16.msra.mxu0 %v93
  %129 = vmatprep.subr.bf16.mxu0 0
  %130 = vmatpush1.bf16.msra.mxu0 %v94
  %131 = vmatprep.subr.bf16.mxu0 0
  %132 = vmatpush1.bf16.msra.mxu0 %v125
  %133 = vmatprep.subr.bf16.mxu0 0
  %134 = vmatpush1.bf16.msra.mxu0 0
  %135 = vmatprep.subr.bf16.mxu0 0
  %136 = vmatpush1.bf16.msra.mxu0 0
  %137 = vmatprep.subr.bf16.mxu0 0
  %138 = vmatpush1.bf16.msra.mxu0 0
  %139 = vmatprep.subr.bf16.mxu0 0
  %140 = vmatpush1.bf16.msra.mxu0 0
  %141 = vmatprep.subr.bf16.mxu0 0
  %142 = vmatpush1.bf16.msra.mxu0 0
  %143 = vmatprep.subr.bf16.mxu0 0
  %144 = vmatpush1.bf16.msra.mxu0 0
  %145 = vmatprep.subr.bf16.mxu0 0
  %146 = vmatpush1.bf16.msra.mxu0 0
  %147 = vmatprep.subr.bf16.mxu0 0
  %148 = vmatpush1.bf16.msra.mxu0 0
  %149 = vmatprep.subr.bf16.mxu0 0
  %150 = vmatpush1.bf16.msra.mxu0 0
  %151 = vmatprep.subr.bf16.mxu0 0
  %152 = vmatpush1.bf16.msra.mxu0 0
  %153 = vmatprep.subr.bf16.mxu0 0
  %154 = vmatpush1.bf16.msra.mxu0 0
  %155 = vmatprep.subr.bf16.mxu0 0
  %156 = vmatpush1.bf16.msra.mxu0 0
  %157 = vmatprep.subr.bf16.mxu0 0
  %158 = vmatpush1.bf16.msra.mxu0 0
  %159 = vmatprep.mubr.bf16.mxu0 0
  %160 = vmatmul.mubr.bf16.gmra.mrb[0].mxu0 %v100
  %v161 = vpop.f32.mrb[0].mxu0
  %v162 = vadd.f32 %v41, %v161
  %v163 = vpop.f32.mrb[0].mxu0
  %v164 = vpop.f32.mrb[0].mxu0
  %v165 = vadd.f32 %v41, %v164
  %v166 = vpop.f32.mrb[0].mxu0
  %167 = vmatprep.mubr.bf16.mxu0 0
  %168 = vmatmul.mubr.bf16.gmra.mrb[0].mxu0 %v103
  %v169 = vpop.f32.mrb[0].mxu0
  %v170 = vadd.f32 %v41, %v169
  %v171 = vpop.f32.mrb[0].mxu0
  %v172 = vpop.f32.mrb[0].mxu0
  %v173 = vadd.f32 %v41, %v172
  %v174 = vpop.f32.mrb[0].mxu0
  %175 = vmatprep.mubr.bf16.mxu0 0
  %176 = vmatmul.mubr.bf16.gmra.mrb[0].mxu0 %v106
  %v177 = vpop.f32.mrb[0].mxu0
  %v178 = vadd.f32 %v41, %v177
  %v179 = vpop.f32.mrb[0].mxu0
  %v180 = vpop.f32.mrb[0].mxu0
  %v181 = vadd.f32 %v41, %v180
  %v182 = vpop.f32.mrb[0].mxu0
  %183 = vmatprep.mubr.bf16.mxu0 0
  %184 = vmatmul.mubr.bf16.gmra.mrb[0].mxu0 %v109
  %v185 = vpop.f32.mrb[0].mxu0
  %v186 = vadd.f32 %v41, %v185
  %v187 = vpop.f32.mrb[0].mxu0
  %v188 = vpop.f32.mrb[0].mxu0
  %v189 = vadd.f32 %v41, %v188
  %v190 = vpop.f32.mrb[0].mxu0
  %191 = vmatprep.mubr.bf16.mxu0 0
  %192 = vmatmul.mubr.bf16.gmra.mrb[0].mxu0 %v112
  %v193 = vpop.f32.mrb[0].mxu0
  %v194 = vadd.f32 %v41, %v193
  %v195 = vpop.f32.mrb[0].mxu0
  %v196 = vpop.f32.mrb[0].mxu0
  %v197 = vadd.f32 %v41, %v196
  %v198 = vpop.f32.mrb[0].mxu0
  %199 = vmatprep.mubr.bf16.mxu0 0
  %200 = vmatmul.mubr.bf16.gmra.mrb[0].mxu0 %v115
  %v201 = vpop.f32.mrb[0].mxu0
  %v202 = vadd.f32 %v41, %v201
  %v203 = vpop.f32.mrb[0].mxu0
  %v204 = vpop.f32.mrb[0].mxu0
  %v205 = vadd.f32 %v41, %v204
  %v206 = vpop.f32.mrb[0].mxu0
  %207 = vmatprep.mubr.bf16.mxu0 0
  %208 = vmatmul.mubr.bf16.gmra.mrb[0].mxu0 %v118
  %v209 = vpop.f32.mrb[0].mxu0
  %v210 = vadd.f32 %v41, %v209
  %v211 = vpop.f32.mrb[0].mxu0
  %v212 = vpop.f32.mrb[0].mxu0
  %v213 = vadd.f32 %v41, %v212
  %v214 = vpop.f32.mrb[0].mxu0
  %215 = vmatprep.mubr.bf16.mxu0 0
  %216 = vmatmul.mubr.bf16.gmra.mrb[0].mxu0 %v121
  %v217 = vpop.f32.mrb[0].mxu0
  %v218 = vadd.f32 %v41, %v217
  %v219 = vpop.f32.mrb[0].mxu0
  %v220 = vpop.f32.mrb[0].mxu0
  %v221 = vadd.f32 %v41, %v220
  %v222 = vpop.f32.mrb[0].mxu0
  %223 = vdwg.mxu0
  %v224 = vmax.f32 %v162, 0.0
  %v225 = vmax.f32 %v165, 0.0
  %v226 = vmax.f32 %v170, 0.0
  %v227 = vmax.f32 %v173, 0.0
  %v228 = vmax.f32 %v178, 0.0
  %v229 = vmax.f32 %v181, 0.0
  %v230 = vmax.f32 %v186, 0.0
  %v231 = vmax.f32 %v189, 0.0
  %v232 = vmax.f32 %v194, 0.0
  %v233 = vmax.f32 %v197, 0.0
  %v234 = vmax.f32 %v202, 0.0
  %v235 = vmax.f32 %v205, 0.0
  %v236 = vmax.f32 %v210, 0.0
  %v237 = vmax.f32 %v213, 0.0
  %v238 = vmax.f32 %v218, 0.0
  %v239 = vmax.f32 %v221, 0.0
  %v240 = vpack.c.bf16 %v225, %v224
  %v241 = vpack.c.bf16 %v227, %v226
  %v242 = vpack.c.bf16 %v229, %v228
  %v243 = vpack.c.bf16 %v231, %v230
  %v244 = vpack.c.bf16 %v233, %v232
  %v245 = vpack.c.bf16 %v235, %v234
  %v246 = vpack.c.bf16 %v237, %v236
  %v247 = vpack.c.bf16 %v239, %v238
  %v256 = vunpack.c.l.b16 %v240
  %v257 = vunpack.c.h.b16 %v240
  %v258 = vunpack.c.l.b16 %v241
  %v259 = vunpack.c.h.b16 %v241
  %v260 = vunpack.c.l.b16 %v242
  %v261 = vunpack.c.h.b16 %v242
  %v262 = vunpack.c.l.b16 %v243
  %v263 = vunpack.c.h.b16 %v243
  %v264 = vunpack.c.l.b16 %v244
  %v265 = vunpack.c.h.b16 %v244
  %v266 = vunpack.c.l.b16 %v245
  %v267 = vunpack.c.h.b16 %v245
  %v268 = vunpack.c.l.b16 %v246
  %v269 = vunpack.c.h.b16 %v246
  %v270 = vunpack.c.l.b16 %v247
  %v271 = vunpack.c.h.b16 %v247
  %v272 = vpack.c.b16 %v256, %v256
  %v273 = vpack.c.b16 %v257, %v257
  %v274 = vpack.c.b16 %v258, %v258
  %v275 = vpack.c.b16 %v259, %v259
  %v276 = vpack.c.b16 %v260, %v260
  %v277 = vpack.c.b16 %v261, %v261
  %v278 = vpack.c.b16 %v262, %v262
  %v279 = vpack.c.b16 %v263, %v263
  %v280 = vpack.c.b16 %v264, %v264
  %v281 = vpack.c.b16 %v265, %v265
  %v282 = vpack.c.b16 %v266, %v266
  %v283 = vpack.c.b16 %v267, %v267
  %v284 = vpack.c.b16 %v268, %v268
  %v285 = vpack.c.b16 %v269, %v269
  %v286 = vpack.c.b16 %v270, %v270
  %v287 = vpack.c.b16 %v271, %v271
  %vm304 = vcmask 60416
  %305 = vst.msk [vmem:[%s3] sm:$0xf] %vm304, %v272
  %306 = vst.msk [vmem:[%s3 + $0x4] sm:$0xf] %vm304, %v273
  %307 = vst.msk [vmem:[%s3 + $0x8] sm:$0xf] %vm304, %v274
  %308 = vst.msk [vmem:[%s3 + $0xc] sm:$0xf] %vm304, %v275
  %309 = vst.msk [vmem:[%s3 + $0x10] sm:$0xf] %vm304, %v276
  %310 = vst.msk [vmem:[%s3 + $0x14] sm:$0xf] %vm304, %v277
  %311 = vst.msk [vmem:[%s3 + $0x18] sm:$0xf] %vm304, %v278
  %312 = vst.msk [vmem:[%s3 + $0x1c] sm:$0xf] %vm304, %v279
  %313 = vst.msk [vmem:[%s3 + $0x20] sm:$0xf] %vm304, %v280
  %314 = vst.msk [vmem:[%s3 + $0x24] sm:$0xf] %vm304, %v281
  %315 = vst.msk [vmem:[%s3 + $0x28] sm:$0xf] %vm304, %v282
  %316 = vst.msk [vmem:[%s3 + $0x2c] sm:$0xf] %vm304, %v283
  %317 = vst.msk [vmem:[%s3 + $0x30] sm:$0xf] %vm304, %v284
  %318 = vst.msk [vmem:[%s3 + $0x34] sm:$0xf] %vm304, %v285
  %319 = vst.msk [vmem:[%s3 + $0x38] sm:$0xf] %vm304, %v286
  %320 = vst.msk [vmem:[%s3 + $0x3c] sm:$0xf] %vm304, %v287
  // Predicated region
  $region14: #{_lambda_.8} parent=0 // pred_check
    _
  $region15: #{_lambda_.8} parent=0 // pred_check_branch
    %322 = sbr.rel (0) target = $region17
  $region16: #{_lambda_.8} parent=0 // pred_region
    _
  $region17: #{_lambda_.8} parent=0 // pred_fallthru
    _
  // Predicated region
  $region18: #{_lambda_.8} parent=0 // pred_check
    _
  $region19: #{_lambda_.8} parent=0 // pred_check_branch
    %324 = sbr.rel (0) target = $region21
  $region20: #{_lambda_.8} parent=0 // pred_region
    _
  $region21: #{_lambda_.8} parent=0 // pred_fallthru
    _

// kernel: _lambda_.9
$region0: #{_lambda_.9}
  #allocation0 [shape = 'u32[]', space=smem, size = 0x4, offset = 0x4, fixed_abs, tag = 'smem constant byte address 0x4 - core index']
  #allocation1 [shape = 'u32[144,128]{1,0:T(1,128)}', space=vmem, size = 0x12000, scoped, tag = 'internal scratch']
  %s0 = inlined_call_operand.vmem [shape: bf16[32,72], index: 0, kind: input, shape index: {}]
  %s1 = inlined_call_operand.vmem [shape: bf16[72,8], index: 1, kind: input, shape index: {}]
  %s2 = inlined_call_operand.vmem [shape: f32[1,8], index: 2, kind: input, shape index: {}]
  %s3 = inlined_call_operand.vmem [shape: bf16[32,8], index: 3, kind: output, shape index: {}]
  %s4 = sld [smem:[#allocation0]]
  $region22: #{_lambda_.9} parent=0
    _
  %s6 = ssub.s32 1, %s4
  %s7 = scalar_select 0, %s6, %s4
  // Predicated region
  $region2: #{_lambda_.9} parent=0 // pred_check
    _
  $region3: #{_lambda_.9} parent=0 // pred_check_branch
    %9 = sbr.rel (0) target = $region5
  $region4: #{_lambda_.9} parent=0 // pred_region
    _
  $region5: #{_lambda_.9} parent=0 // pred_fallthru
    _
  // Predicated region
  $region6: #{_lambda_.9} parent=0 // pred_check
    _
  $region7: #{_lambda_.9} parent=0 // pred_check_branch
    %11 = sbr.rel (0) target = $region9
  $region8: #{_lambda_.9} parent=0 // pred_region
    _
  $region9: #{_lambda_.9} parent=0 // pred_fallthru
    _
  // Predicated region
  $region10: #{_lambda_.9} parent=0 // pred_check
    _
  $region11: #{_lambda_.9} parent=0 // pred_check_branch
    %13 = sbr.rel (0) target = $region13
  $region12: #{_lambda_.9} parent=0 // pred_region
    _
  $region13: #{_lambda_.9} parent=0 // pred_fallthru
    _
  %v15 = vld [vmem:[%s0] sm:$0xf]
  %v16 = vld [vmem:[%s0 + $0x4] sm:$0xf]
  %v17 = vld [vmem:[%s0 + $0x8] sm:$0xf]
  %v18 = vld [vmem:[%s0 + $0xc] sm:$0xf]
  %v19 = vld [vmem:[%s1] sm:$0xf]
  %v20 = vld [vmem:[%s1 + $0x4] sm:$0xf]
  %v21 = vld [vmem:[%s1 + $0x8] sm:$0xf]
  %v22 = vld [vmem:[%s1 + $0xc] sm:$0xf]
  %v23 = vld [vmem:[%s1 + $0x10] sm:$0xf]
  %v24 = vld [vmem:[%s1 + $0x14] sm:$0xf]
  %v25 = vld [vmem:[%s1 + $0x18] sm:$0xf]
  %v26 = vld [vmem:[%s1 + $0x1c] sm:$0xf]
  %v27 = vld [vmem:[%s1 + $0x20] sm:$0xf]
  %v28 = vld [vmem:[%s2] sm:$0x1]
  %v30 = vlaneseq
  %v31 = vshrl.u32 %v30, 7
  %v32 = vsub.s32 0, %v31
  %v33 = vrot.slane %v28, %v32
  %v39 = vunpack.c.l.b16 %v15
  %v40 = vunpack.c.l.b16 %v16
  %v41 = vunpack.c.l.b16 %v17
  %v42 = vunpack.c.l.b16 %v18
  %v43 = vpack.c.b16 %v40, %v39
  %v44 = vpack.c.b16 %v42, %v41
  %v54 = vunpack.c.l.b16 %v19
  %v55 = vunpack.c.l.b16 %v20
  %v56 = vunpack.c.l.b16 %v21
  %v57 = vunpack.c.l.b16 %v22
  %v58 = vunpack.c.l.b16 %v23
  %v59 = vunpack.c.l.b16 %v24
  %v60 = vunpack.c.l.b16 %v25
  %v61 = vunpack.c.l.b16 %v26
  %v62 = vunpack.c.l.b16 %v27
  %v63 = vpack.c.b16 %v55, %v54
  %v64 = vpack.c.b16 %v57, %v56
  %v65 = vpack.c.b16 %v59, %v58
  %v66 = vpack.c.b16 %v61, %v60
  %v67 = vpack.c.b16 %v62, %v62
  %vm72 = vcmask 588800
  %v74 = vsel %vm72, %v43, 0
  %v77 = vsel %vm72, %v44, 0
  %vm79 = vcmask 1043456
  %v81 = vsel %vm79, %v67, 0
  %83 = vmatprep.subr.bf16.mxu0 0
  %84 = vmatpush1.bf16.msra.mxu0 %v63
  %85 = vmatprep.subr.bf16.mxu0 0
  %86 = vmatpush1.bf16.msra.mxu0 %v64
  %87 = vmatprep.subr.bf16.mxu0 0
  %88 = vmatpush1.bf16.msra.mxu0 %v65
  %89 = vmatprep.subr.bf16.mxu0 0
  %90 = vmatpush1.bf16.msra.mxu0 %v66
  %91 = vmatprep.subr.bf16.mxu0 0
  %92 = vmatpush1.bf16.msra.mxu0 %v81
  %93 = vmatprep.subr.bf16.mxu0 0
  %94 = vmatpush1.bf16.msra.mxu0 0
  %95 = vmatprep.subr.bf16.mxu0 0
  %96 = vmatpush1.bf16.msra.mxu0 0
  %97 = vmatprep.subr.bf16.mxu0 0
  %98 = vmatpush1.bf16.msra.mxu0 0
  %99 = vmatprep.subr.bf16.mxu0 0
  %100 = vmatpush1.bf16.msra.mxu0 0
  %101 = vmatprep.subr.bf16.mxu0 0
  %102 = vmatpush1.bf16.msra.mxu0 0
  %103 = vmatprep.subr.bf16.mxu0 0
  %104 = vmatpush1.bf16.msra.mxu0 0
  %105 = vmatprep.subr.bf16.mxu0 0
  %106 = vmatpush1.bf16.msra.mxu0 0
  %107 = vmatprep.subr.bf16.mxu0 0
  %108 = vmatpush1.bf16.msra.mxu0 0
  %109 = vmatprep.subr.bf16.mxu0 0
  %110 = vmatpush1.bf16.msra.mxu0 0
  %111 = vmatprep.subr.bf16.mxu0 0
  %112 = vmatpush1.bf16.msra.mxu0 0
  %113 = vmatprep.subr.bf16.mxu0 0
  %114 = vmatpush1.bf16.msra.mxu0 0
  %115 = vmatprep.mubr.bf16.mxu0 0
  %116 = vmatmul.mubr.bf16.gmra.mrb[0].mxu0 %v74
  %v117 = vpop.f32.mrb[0].mxu0
  %v118 = vadd.f32 %v33, %v117
  %v119 = vpop.f32.mrb[0].mxu0
  %v120 = vpop.f32.mrb[0].mxu0
  %v121 = vadd.f32 %v33, %v120
  %v122 = vpop.f32.mrb[0].mxu0
  %123 = vmatprep.mubr.bf16.mxu0 0
  %124 = vmatmul.mubr.bf16.gmra.mrb[0].mxu0 %v77
  %v125 = vpop.f32.mrb[0].mxu0
  %v126 = vadd.f32 %v33, %v125
  %v127 = vpop.f32.mrb[0].mxu0
  %v128 = vpop.f32.mrb[0].mxu0
  %v129 = vadd.f32 %v33, %v128
  %v130 = vpop.f32.mrb[0].mxu0
  %131 = vdwg.mxu0
  %v132 = vmax.f32 %v118, 0.0
  %v133 = vmax.f32 %v121, 0.0
  %v134 = vmax.f32 %v126, 0.0
  %v135 = vmax.f32 %v129, 0.0
  %v136 = vpack.c.bf16 %v133, %v132
  %v137 = vpack.c.bf16 %v135, %v134
  %v140 = vunpack.c.l.b16 %v136
  %v141 = vunpack.c.h.b16 %v136
  %v142 = vunpack.c.l.b16 %v137
  %v143 = vunpack.c.h.b16 %v137
  %v144 = vpack.c.b16 %v140, %v140
  %v145 = vpack.c.b16 %v141, %v141
  %v146 = vpack.c.b16 %v142, %v142
  %v147 = vpack.c.b16 %v143, %v143
  %vm152 = vcmask 60416
  %153 = vst.msk [vmem:[%s3] sm:$0xf] %vm152, %v144
  %154 = vst.msk [vmem:[%s3 + $0x4] sm:$0xf] %vm152, %v145
  %155 = vst.msk [vmem:[%s3 + $0x8] sm:$0xf] %vm152, %v146
  %156 = vst.msk [vmem:[%s3 + $0xc] sm:$0xf] %vm152, %v147
  // Predicated region
  $region14: #{_lambda_.9} parent=0 // pred_check
    _
  $region15: #{_lambda_.9} parent=0 // pred_check_branch
    %158 = sbr.rel (0) target = $region17
  $region16: #{_lambda_.9} parent=0 // pred_region
    _
  $region17: #{_lambda_.9} parent=0 // pred_fallthru
    _
  // Predicated region
  $region18: #{_lambda_.9} parent=0 // pred_check
    _
  $region19: #{_lambda_.9} parent=0 // pred_check_branch
    %160 = sbr.rel (0) target = $region21
  $region20: #{_lambda_.9} parent=0 // pred_region
    _
  $region21: #{_lambda_.9} parent=0 // pred_fallthru
    _

// kernel: _lambda_.10
$region0: #{_lambda_.10}
  #allocation0 [shape = 'u32[]', space=smem, size = 0x4, offset = 0x4, fixed_abs, tag = 'smem constant byte address 0x4 - core index']
  #allocation1 [shape = 'u32[144,128]{1,0:T(1,128)}', space=vmem, size = 0x12000, scoped, tag = 'internal scratch']
  %s0 = inlined_call_operand.vmem [shape: bf16[8,72], index: 0, kind: input, shape index: {}]
  %s1 = inlined_call_operand.vmem [shape: bf16[72,16], index: 1, kind: input, shape index: {}]
  %s2 = inlined_call_operand.vmem [shape: f32[1,16], index: 2, kind: input, shape index: {}]
  %s3 = inlined_call_operand.vmem [shape: bf16[8,16], index: 3, kind: output, shape index: {}]
  %s4 = sld [smem:[#allocation0]]
  $region22: #{_lambda_.10} parent=0
    _
  %s6 = ssub.s32 1, %s4
  %s7 = scalar_select 0, %s6, %s4
  // Predicated region
  $region2: #{_lambda_.10} parent=0 // pred_check
    _
  $region3: #{_lambda_.10} parent=0 // pred_check_branch
    %9 = sbr.rel (0) target = $region5
  $region4: #{_lambda_.10} parent=0 // pred_region
    _
  $region5: #{_lambda_.10} parent=0 // pred_fallthru
    _
  // Predicated region
  $region6: #{_lambda_.10} parent=0 // pred_check
    _
  $region7: #{_lambda_.10} parent=0 // pred_check_branch
    %11 = sbr.rel (0) target = $region9
  $region8: #{_lambda_.10} parent=0 // pred_region
    _
  $region9: #{_lambda_.10} parent=0 // pred_fallthru
    _
  // Predicated region
  $region10: #{_lambda_.10} parent=0 // pred_check
    _
  $region11: #{_lambda_.10} parent=0 // pred_check_branch
    %13 = sbr.rel (0) target = $region13
  $region12: #{_lambda_.10} parent=0 // pred_region
    _
  $region13: #{_lambda_.10} parent=0 // pred_fallthru
    _
  %v15 = vld [vmem:[%s0] sm:$0xf]
  %v16 = vld [vmem:[%s1] sm:$0xf]
  %v17 = vld [vmem:[%s1 + $0x4] sm:$0xf]
  %v18 = vld [vmem:[%s1 + $0x8] sm:$0xf]
  %v19 = vld [vmem:[%s1 + $0xc] sm:$0xf]
  %v20 = vld [vmem:[%s1 + $0x10] sm:$0xf]
  %v21 = vld [vmem:[%s1 + $0x14] sm:$0xf]
  %v22 = vld [vmem:[%s1 + $0x18] sm:$0xf]
  %v23 = vld [vmem:[%s1 + $0x1c] sm:$0xf]
  %v24 = vld [vmem:[%s1 + $0x20] sm:$0xf]
  %v25 = vld [vmem:[%s2] sm:$0x1]
  %v27 = vlaneseq
  %v28 = vshrl.u32 %v27, 7
  %v29 = vsub.s32 0, %v28
  %v30 = vrot.slane %v25, %v29
  %v41 = vunpack.c.l.b16 %v16
  %v42 = vunpack.c.l.b16 %v17
  %v43 = vunpack.c.l.b16 %v18
  %v44 = vunpack.c.l.b16 %v19
  %v45 = vunpack.c.l.b16 %v20
  %v46 = vunpack.c.l.b16 %v21
  %v47 = vunpack.c.l.b16 %v22
  %v48 = vunpack.c.l.b16 %v23
  %v49 = vunpack.c.l.b16 %v24
  %v50 = vpack.c.b16 %v42, %v41
  %v51 = vpack.c.b16 %v44, %v43
  %v52 = vpack.c.b16 %v46, %v45
  %v53 = vpack.c.b16 %v48, %v47
  %v54 = vpack.c.b16 %v49, %v49
  %vm59 = vcmask 588800
  %v61 = vsel %vm59, %v15, 0
  %vm63 = vcmask 1043456
  %v65 = vsel %vm63, %v54, 0
  %67 = vmatprep.subr.bf16.mxu0 0
  %68 = vmatpush1.bf16.msra.mxu0 %v50
  %69 = vmatprep.subr.bf16.mxu0 0
  %70 = vmatpush1.bf16.msra.mxu0 %v51
  %71 = vmatprep.subr.bf16.mxu0 0
  %72 = vmatpush1.bf16.msra.mxu0 %v52
  %73 = vmatprep.subr.bf16.mxu0 0
  %74 = vmatpush1.bf16.msra.mxu0 %v53
  %75 = vmatprep.subr.bf16.mxu0 0
  %76 = vmatpush1.bf16.msra.mxu0 %v65
  %77 = vmatprep.subr.bf16.mxu0 0
  %78 = vmatpush1.bf16.msra.mxu0 0
  %79 = vmatprep.subr.bf16.mxu0 0
  %80 = vmatpush1.bf16.msra.mxu0 0
  %81 = vmatprep.subr.bf16.mxu0 0
  %82 = vmatpush1.bf16.msra.mxu0 0
  %83 = vmatprep.subr.bf16.mxu0 0
  %84 = vmatpush1.bf16.msra.mxu0 0
  %85 = vmatprep.subr.bf16.mxu0 0
  %86 = vmatpush1.bf16.msra.mxu0 0
  %87 = vmatprep.subr.bf16.mxu0 0
  %88 = vmatpush1.bf16.msra.mxu0 0
  %89 = vmatprep.subr.bf16.mxu0 0
  %90 = vmatpush1.bf16.msra.mxu0 0
  %91 = vmatprep.subr.bf16.mxu0 0
  %92 = vmatpush1.bf16.msra.mxu0 0
  %93 = vmatprep.subr.bf16.mxu0 0
  %94 = vmatpush1.bf16.msra.mxu0 0
  %95 = vmatprep.subr.bf16.mxu0 0
  %96 = vmatpush1.bf16.msra.mxu0 0
  %97 = vmatprep.subr.bf16.mxu0 0
  %98 = vmatpush1.bf16.msra.mxu0 0
  %99 = vmatprep.mubr.bf16.mxu0 0
  %100 = vmatmul.mubr.bf16.gmra.mrb[0].mxu0 %v61
  %v101 = vpop.f32.mrb[0].mxu0
  %v102 = vadd.f32 %v30, %v101
  %v103 = vpop.f32.mrb[0].mxu0
  %v104 = vpop.f32.mrb[0].mxu0
  %v105 = vpop.f32.mrb[0].mxu0
  %106 = vdwg.mxu0
  %v107 = vmax.f32 %v102, 0.0
  %v108 = vpack.c.bf16 %v107, %v107
  %vm109 = vcmask 125952
  %110 = vst.msk [vmem:[%s3] sm:$0xf] %vm109, %v108
  // Predicated region
  $region14: #{_lambda_.10} parent=0 // pred_check
    _
  $region15: #{_lambda_.10} parent=0 // pred_check_branch
    %112 = sbr.rel (0) target = $region17
  $region16: #{_lambda_.10} parent=0 // pred_region
    _
  $region17: #{_lambda_.10} parent=0 // pred_fallthru
    _
  // Predicated region
  $region18: #{_lambda_.10} parent=0 // pred_check
    _
  $region19: #{_lambda_.10} parent=0 // pred_check_branch
    %114 = sbr.rel (0) target = $region21
  $region20: #{_lambda_.10} parent=0 // pred_region
    _
  $region21: #{_lambda_.10} parent=0 // pred_fallthru
    _

// kernel: _lambda_.11
$region0: #{_lambda_.11}
  #allocation0 [shape = 'u32[]', space=smem, size = 0x4, offset = 0x4, fixed_abs, tag = 'smem constant byte address 0x4 - core index']
  #allocation1 [shape = 'u32[144,128]{1,0:T(1,128)}', space=vmem, size = 0x12000, scoped, tag = 'internal scratch']
  %s0 = inlined_call_operand.vmem [shape: bf16[2,144], index: 0, kind: input, shape index: {}]
  %s1 = inlined_call_operand.vmem [shape: bf16[144,32], index: 1, kind: input, shape index: {}]
  %s2 = inlined_call_operand.vmem [shape: f32[1,32], index: 2, kind: input, shape index: {}]
  %s3 = inlined_call_operand.vmem [shape: bf16[2,32], index: 3, kind: output, shape index: {}]
  %s4 = sld [smem:[#allocation0]]
  $region22: #{_lambda_.11} parent=0
    _
  %s6 = ssub.s32 1, %s4
  %s7 = scalar_select 0, %s6, %s4
  // Predicated region
  $region2: #{_lambda_.11} parent=0 // pred_check
    _
  $region3: #{_lambda_.11} parent=0 // pred_check_branch
    %9 = sbr.rel (0) target = $region5
  $region4: #{_lambda_.11} parent=0 // pred_region
    _
  $region5: #{_lambda_.11} parent=0 // pred_fallthru
    _
  // Predicated region
  $region6: #{_lambda_.11} parent=0 // pred_check
    _
  $region7: #{_lambda_.11} parent=0 // pred_check_branch
    %11 = sbr.rel (0) target = $region9
  $region8: #{_lambda_.11} parent=0 // pred_region
    _
  $region9: #{_lambda_.11} parent=0 // pred_fallthru
    _
  // Predicated region
  $region10: #{_lambda_.11} parent=0 // pred_check
    _
  $region11: #{_lambda_.11} parent=0 // pred_check_branch
    %13 = sbr.rel (0) target = $region13
  $region12: #{_lambda_.11} parent=0 // pred_region
    _
  $region13: #{_lambda_.11} parent=0 // pred_fallthru
    _
  %v15 = vld [vmem:[%s0] sm:$0x3]
  %v16 = vld [vmem:[%s1] sm:$0xf]
  %v17 = vld [vmem:[%s1 + $0x4] sm:$0xf]
  %v18 = vld [vmem:[%s1 + $0x8] sm:$0xf]
  %v19 = vld [vmem:[%s1 + $0xc] sm:$0xf]
  %v20 = vld [vmem:[%s1 + $0x10] sm:$0xf]
  %v21 = vld [vmem:[%s1 + $0x14] sm:$0xf]
  %v22 = vld [vmem:[%s1 + $0x18] sm:$0xf]
  %v23 = vld [vmem:[%s1 + $0x1c] sm:$0xf]
  %v24 = vld [vmem:[%s1 + $0x20] sm:$0xf]
  %v25 = vld [vmem:[%s1 + $0x24] sm:$0xf]
  %v26 = vld [vmem:[%s1 + $0x28] sm:$0xf]
  %v27 = vld [vmem:[%s1 + $0x2c] sm:$0xf]
  %v28 = vld [vmem:[%s1 + $0x30] sm:$0xf]
  %v29 = vld [vmem:[%s1 + $0x34] sm:$0xf]
  %v30 = vld [vmem:[%s1 + $0x38] sm:$0xf]
  %v31 = vld [vmem:[%s1 + $0x3c] sm:$0xf]
  %v32 = vld [vmem:[%s1 + $0x40] sm:$0xf]
  %v33 = vld [vmem:[%s1 + $0x44] sm:$0xf]
  %v34 = vld [vmem:[%s2] sm:$0x1]
  %v36 = vlaneseq
  %v37 = vshrl.u32 %v36, 7
  %v38 = vsub.s32 0, %v37
  %v39 = vrot.slane %v34, %v38
  %v43 = vunpack.c.l.s4 1966171168
  %v44 = vunpack.c.0.s8 %v43
  %v45 = vlaneseq
  %v46 = vshrl.u32 %v45, 7
  %v47 = vsub.s32 %v44, %v46
  %v48 = vrot.slane %v15, %v47
  %v49 = vcombine.high %v48, %v48
  %v51 = vunpack.c.l.s4 1966171168
  %v52 = vunpack.c.0.s8 %v51
  %v53 = vlaneseq
  %v54 = vshrl.u32 %v53, 7
  %v55 = vsub.s32 %v52, %v54
  %v56 = vrot.slane %v48, %v55
  %v58 = vunpack.c.l.s4 1966171168
  %v59 = vunpack.c.0.s8 %v58
  %v60 = vlaneseq
  %v61 = vshrl.u32 %v60, 7
  %v62 = vsub.s32 %v59, %v61
  %v63 = vrot.slane %v49, %v62
  %v83 = vunpack.c.l.b16 %v16
  %v84 = vunpack.c.l.b16 %v17
  %v85 = vunpack.c.l.b16 %v18
  %v86 = vunpack.c.l.b16 %v19
  %v87 = vunpack.c.l.b16 %v20
  %v88 = vunpack.c.l.b16 %v21
  %v89 = vunpack.c.l.b16 %v22
  %v90 = vunpack.c.l.b16 %v23
  %v91 = vunpack.c.l.b16 %v24
  %v92 = vunpack.c.l.b16 %v25
  %v93 = vunpack.c.l.b16 %v26
  %v94 = vunpack.c.l.b16 %v27
  %v95 = vunpack.c.l.b16 %v28
  %v96 = vunpack.c.l.b16 %v29
  %v97 = vunpack.c.l.b16 %v30
  %v98 = vunpack.c.l.b16 %v31
  %v99 = vunpack.c.l.b16 %v32
  %v100 = vunpack.c.l.b16 %v33
  %v101 = vpack.c.b16 %v84, %v83
  %v102 = vpack.c.b16 %v86, %v85
  %v103 = vpack.c.b16 %v88, %v87
  %v104 = vpack.c.b16 %v90, %v89
  %v105 = vpack.c.b16 %v92, %v91
  %v106 = vpack.c.b16 %v94, %v93
  %v107 = vpack.c.b16 %v96, %v95
  %v108 = vpack.c.b16 %v98, %v97
  %v109 = vpack.c.b16 %v100, %v99
  %vm119 = vcmask 130048
  %v121 = vsel %vm119, %v63, 0
  %123 = vmatprep.subr.bf16.mxu0 0
  %124 = vmatpush1.bf16.msra.mxu0 %v101
  %125 = vmatprep.subr.bf16.mxu0 0
  %126 = vmatpush1.bf16.msra.mxu0 %v102
  %127 = vmatprep.subr.bf16.mxu0 0
  %128 = vmatpush1.bf16.msra.mxu0 %v103
  %129 = vmatprep.subr.bf16.mxu0 0
  %130 = vmatpush1.bf16.msra.mxu0 %v104
  %131 = vmatprep.subr.bf16.mxu0 0
  %132 = vmatpush1.bf16.msra.mxu0 %v105
  %133 = vmatprep.subr.bf16.mxu0 0
  %134 = vmatpush1.bf16.msra.mxu0 %v106
  %135 = vmatprep.subr.bf16.mxu0 0
  %136 = vmatpush1.bf16.msra.mxu0 %v107
  %137 = vmatprep.subr.bf16.mxu0 0
  %138 = vmatpush1.bf16.msra.mxu0 %v108
  %139 = vmatprep.subr.bf16.mxu0 0
  %140 = vmatpush1.bf16.msra.mxu0 %v109
  %141 = vmatprep.subr.bf16.mxu0 0
  %142 = vmatpush1.bf16.msra.mxu0 0
  %143 = vmatprep.subr.bf16.mxu0 0
  %144 = vmatpush1.bf16.msra.mxu0 0
  %145 = vmatprep.subr.bf16.mxu0 0
  %146 = vmatpush1.bf16.msra.mxu0 0
  %147 = vmatprep.subr.bf16.mxu0 0
  %148 = vmatpush1.bf16.msra.mxu0 0
  %149 = vmatprep.subr.bf16.mxu0 0
  %150 = vmatpush1.bf16.msra.mxu0 0
  %151 = vmatprep.subr.bf16.mxu0 0
  %152 = vmatpush1.bf16.msra.mxu0 0
  %153 = vmatprep.subr.bf16.mxu0 0
  %154 = vmatpush1.bf16.msra.mxu0 0
  %155 = vmatprep.mubr.bf16.mxu0 %v121
  %156 = vmatmul.mubr.bf16.gmra.mrb[0].mxu0 %v56
  %v157 = vpop.f32.mrb[0].mxu0
  %v158 = vadd.f32 %v39, %v157
  %v159 = vpop.f32.mrb[0].mxu0
  %v160 = vpop.f32.mrb[0].mxu0
  %v161 = vpop.f32.mrb[0].mxu0
  %162 = vdwg.mxu0
  %v163 = vmax.f32 %v158, 0.0
  %v164 = vpack.c.bf16 %v163, %v163
  %vm165 = vcmask 253952
  %166 = vst.msk [vmem:[%s3] sm:$0x1] %vm165, %v164
  // Predicated region
  $region14: #{_lambda_.11} parent=0 // pred_check
    _
  $region15: #{_lambda_.11} parent=0 // pred_check_branch
    %168 = sbr.rel (0) target = $region17
  $region16: #{_lambda_.11} parent=0 // pred_region
    _
  $region17: #{_lambda_.11} parent=0 // pred_fallthru
    _
  // Predicated region
  $region18: #{_lambda_.11} parent=0 // pred_check
    _
  $region19: #{_lambda_.11} parent=0 // pred_check_branch
    %170 = sbr.rel (0) target = $region21
  $region20: #{_lambda_.11} parent=0 // pred_region
    _
  $region21: #{_lambda_.11} parent=0 // pred_fallthru
    _

// kernel: _lambda_.12
$region0: #{_lambda_.12}
  #allocation0 [shape = 'u32[]', space=smem, size = 0x4, offset = 0x4, fixed_abs, tag = 'smem constant byte address 0x4 - core index']
  #allocation1 [shape = 'u32[144,128]{1,0:T(1,128)}', space=vmem, size = 0x12000, scoped, tag = 'internal scratch']
  %s0 = inlined_call_operand.vmem [shape: bf16[32,8], index: 0, kind: input, shape index: {}]
  %s1 = inlined_call_operand.vmem [shape: bf16[8,32], index: 1, kind: input, shape index: {}]
  %s2 = inlined_call_operand.vmem [shape: f32[1,32], index: 2, kind: input, shape index: {}]
  %s3 = inlined_call_operand.vmem [shape: bf16[8,16], index: 3, kind: input, shape index: {}]
  %s4 = inlined_call_operand.vmem [shape: bf16[16,64], index: 4, kind: input, shape index: {}]
  %s5 = inlined_call_operand.vmem [shape: f32[1,64], index: 5, kind: input, shape index: {}]
  %s6 = inlined_call_operand.vmem [shape: bf16[2,32], index: 6, kind: input, shape index: {}]
  %s7 = inlined_call_operand.vmem [shape: bf16[32,128], index: 7, kind: input, shape index: {}]
  %s8 = inlined_call_operand.vmem [shape: f32[1,128], index: 8, kind: input, shape index: {}]
  %s9 = inlined_call_operand.vmem [shape: bf16[8,32], index: 9, kind: output, shape index: {0}]
  %s10 = inlined_call_operand.vmem [shape: bf16[8,64], index: 10, kind: output, shape index: {1}]
  %s11 = inlined_call_operand.vmem [shape: bf16[2,128], index: 11, kind: output, shape index: {2}]
  %12 = xla_tuple %s9, %s10, %s11
  %s13 = sld [smem:[#allocation0]]
  $region62: #{_lambda_.12} parent=0
    _
  %s15 = ssub.s32 1, %s13
  %s16 = scalar_select 0, %s15, %s13
  // Predicated region
  $region2: #{_lambda_.12} parent=0 // pred_check
    _
  $region3: #{_lambda_.12} parent=0 // pred_check_branch
    %18 = sbr.rel (0) target = $region5
  $region4: #{_lambda_.12} parent=0 // pred_region
    _
  $region5: #{_lambda_.12} parent=0 // pred_fallthru
    _
  // Predicated region
  $region6: #{_lambda_.12} parent=0 // pred_check
    _
  $region7: #{_lambda_.12} parent=0 // pred_check_branch
    %20 = sbr.rel (0) target = $region9
  $region8: #{_lambda_.12} parent=0 // pred_region
    _
  $region9: #{_lambda_.12} parent=0 // pred_fallthru
    _
  // Predicated region
  $region10: #{_lambda_.12} parent=0 // pred_check
    _
  $region11: #{_lambda_.12} parent=0 // pred_check_branch
    %22 = sbr.rel (0) target = $region13
  $region12: #{_lambda_.12} parent=0 // pred_region
    _
  $region13: #{_lambda_.12} parent=0 // pred_fallthru
    _
  // Predicated region
  $region14: #{_lambda_.12} parent=0 // pred_check
    _
  $region15: #{_lambda_.12} parent=0 // pred_check_branch
    %24 = sbr.rel (0) target = $region17
  $region16: #{_lambda_.12} parent=0 // pred_region
    _
  $region17: #{_lambda_.12} parent=0 // pred_fallthru
    _
  // Predicated region
  $region18: #{_lambda_.12} parent=0 // pred_check
    _
  $region19: #{_lambda_.12} parent=0 // pred_check_branch
    %26 = sbr.rel (0) target = $region21
  $region20: #{_lambda_.12} parent=0 // pred_region
    _
  $region21: #{_lambda_.12} parent=0 // pred_fallthru
    _
  // Predicated region
  $region22: #{_lambda_.12} parent=0 // pred_check
    _
  $region23: #{_lambda_.12} parent=0 // pred_check_branch
    %28 = sbr.rel (0) target = $region25
  $region24: #{_lambda_.12} parent=0 // pred_region
    _
  $region25: #{_lambda_.12} parent=0 // pred_fallthru
    _
  // Predicated region
  $region26: #{_lambda_.12} parent=0 // pred_check
    _
  $region27: #{_lambda_.12} parent=0 // pred_check_branch
    %30 = sbr.rel (0) target = $region29
  $region28: #{_lambda_.12} parent=0 // pred_region
    _
  $region29: #{_lambda_.12} parent=0 // pred_fallthru
    _
  // Predicated region
  $region30: #{_lambda_.12} parent=0 // pred_check
    _
  $region31: #{_lambda_.12} parent=0 // pred_check_branch
    %32 = sbr.rel (0) target = $region33
  $region32: #{_lambda_.12} parent=0 // pred_region
    _
  $region33: #{_lambda_.12} parent=0 // pred_fallthru
    _
  // Predicated region
  $region34: #{_lambda_.12} parent=0 // pred_check
    _
  $region35: #{_lambda_.12} parent=0 // pred_check_branch
    %34 = sbr.rel (0) target = $region37
  $region36: #{_lambda_.12} parent=0 // pred_region
    _
  $region37: #{_lambda_.12} parent=0 // pred_fallthru
    _
  %v36 = vld [vmem:[%s0] sm:$0xf]
  %v37 = vld [vmem:[%s0 + $0x4] sm:$0xf]
  %v38 = vld [vmem:[%s0 + $0x8] sm:$0xf]
  %v39 = vld [vmem:[%s0 + $0xc] sm:$0xf]
  %v40 = vld [vmem:[%s1] sm:$0xf]
  %v41 = vld [vmem:[%s2] sm:$0x1]
  %v43 = vlaneseq
  %v44 = vshrl.u32 %v43, 7
  %v45 = vsub.s32 0, %v44
  %v46 = vrot.slane %v41, %v45
  %v52 = vunpack.c.l.b16 %v36
  %v53 = vunpack.c.l.b16 %v37
  %v54 = vunpack.c.l.b16 %v38
  %v55 = vunpack.c.l.b16 %v39
  %v56 = vpack.c.b16 %v53, %v52
  %v57 = vpack.c.b16 %v55, %v54
  %vm58 = vcmask 64512
  %v60 = vsel %vm58, %v56, 0
  %v63 = vsel %vm58, %v57, 0
  %vm65 = vcmask 1043456
  %v67 = vsel %vm65, %v40, 0
  %69 = vmatprep.subr.bf16.mxu0 0
  %70 = vmatpush1.bf16.msra.mxu0 %v67
  %71 = vmatprep.subr.bf16.mxu0 0
  %72 = vmatpush1.bf16.msra.mxu0 0
  %73 = vmatprep.subr.bf16.mxu0 0
  %74 = vmatpush1.bf16.msra.mxu0 0
  %75 = vmatprep.subr.bf16.mxu0 0
  %76 = vmatpush1.bf16.msra.mxu0 0
  %77 = vmatprep.subr.bf16.mxu0 0
  %78 = vmatpush1.bf16.msra.mxu0 0
  %79 = vmatprep.subr.bf16.mxu0 0
  %80 = vmatpush1.bf16.msra.mxu0 0
  %81 = vmatprep.subr.bf16.mxu0 0
  %82 = vmatpush1.bf16.msra.mxu0 0
  %83 = vmatprep.subr.bf16.mxu0 0
  %84 = vmatpush1.bf16.msra.mxu0 0
  %85 = vmatprep.subr.bf16.mxu0 0
  %86 = vmatpush1.bf16.msra.mxu0 0
  %87 = vmatprep.subr.bf16.mxu0 0
  %88 = vmatpush1.bf16.msra.mxu0 0
  %89 = vmatprep.subr.bf16.mxu0 0
  %90 = vmatpush1.bf16.msra.mxu0 0
  %91 = vmatprep.subr.bf16.mxu0 0
  %92 = vmatpush1.bf16.msra.mxu0 0
  %93 = vmatprep.subr.bf16.mxu0 0
  %94 = vmatpush1.bf16.msra.mxu0 0
  %95 = vmatprep.subr.bf16.mxu0 0
  %96 = vmatpush1.bf16.msra.mxu0 0
  %97 = vmatprep.subr.bf16.mxu0 0
  %98 = vmatpush1.bf16.msra.mxu0 0
  %99 = vmatprep.subr.bf16.mxu0 0
  %100 = vmatpush1.bf16.msra.mxu0 0
  %101 = vmatprep.mubr.bf16.mxu0 0
  %102 = vmatmul.mubr.bf16.gmra.mrb[0].mxu0 %v60
  %v103 = vpop.f32.mrb[0].mxu0
  %v104 = vadd.f32 %v46, %v103
  %v105 = vpop.f32.mrb[0].mxu0
  %v106 = vpop.f32.mrb[0].mxu0
  %v107 = vadd.f32 %v46, %v106
  %v108 = vpop.f32.mrb[0].mxu0
  %109 = vmatprep.mubr.bf16.mxu0 0
  %110 = vmatmul.mubr.bf16.gmra.mrb[0].mxu0 %v63
  %v111 = vpop.f32.mrb[0].mxu0
  %v112 = vadd.f32 %v46, %v111
  %v113 = vpop.f32.mrb[0].mxu0
  %v114 = vpop.f32.mrb[0].mxu0
  %v115 = vadd.f32 %v46, %v114
  %v116 = vpop.f32.mrb[0].mxu0
  %117 = vdwg.mxu0
  %v118 = vmax.f32 %v104, 0.0
  %v119 = vmax.f32 %v107, 0.0
  %v120 = vmax.f32 %v112, 0.0
  %v121 = vmax.f32 %v115, 0.0
  %v122 = vadd.f32 %v118, %v119
  %v123 = vadd.f32 %v122, %v120
  %v124 = vadd.f32 %v123, %v121
  %v125 = vmul.f32 %v124, 0.25
  %v126 = vpack.c.bf16 %v125, %v125
  %vm127 = vcmask 257024
  %128 = vst.msk [vmem:[%s9] sm:$0xf] %vm127, %v126
  %v129 = vld [vmem:[%s3] sm:$0xf]
  %v130 = vld [vmem:[%s4] sm:$0xf]
  %v131 = vld [vmem:[%s4 + $0x4] sm:$0xf]
  %v132 = vld [vmem:[%s5] sm:$0x1]
  %v134 = vlaneseq
  %v135 = vshrl.u32 %v134, 7
  %v136 = vsub.s32 0, %v135
  %v137 = vrot.slane %v132, %v136
  %v141 = vunpack.c.l.b16 %v130
  %v142 = vunpack.c.l.b16 %v131
  %v143 = vpack.c.b16 %v142, %v141
  %vm145 = vcmask 130048
  %v147 = vsel %vm145, %v129, 0
  %149 = vmatprep.subr.bf16.mxu0 0
  %150 = vmatpush1.bf16.msra.mxu0 %v143
  %151 = vmatprep.subr.bf16.mxu0 0
  %152 = vmatpush1.bf16.msra.mxu0 0
  %153 = vmatprep.subr.bf16.mxu0 0
  %154 = vmatpush1.bf16.msra.mxu0 0
  %155 = vmatprep.subr.bf16.mxu0 0
  %156 = vmatpush1.bf16.msra.mxu0 0
  %157 = vmatprep.subr.bf16.mxu0 0
  %158 = vmatpush1.bf16.msra.mxu0 0
  %159 = vmatprep.subr.bf16.mxu0 0
  %160 = vmatpush1.bf16.msra.mxu0 0
  %161 = vmatprep.subr.bf16.mxu0 0
  %162 = vmatpush1.bf16.msra.mxu0 0
  %163 = vmatprep.subr.bf16.mxu0 0
  %164 = vmatpush1.bf16.msra.mxu0 0
  %165 = vmatprep.subr.bf16.mxu0 0
  %166 = vmatpush1.bf16.msra.mxu0 0
  %167 = vmatprep.subr.bf16.mxu0 0
  %168 = vmatpush1.bf16.msra.mxu0 0
  %169 = vmatprep.subr.bf16.mxu0 0
  %170 = vmatpush1.bf16.msra.mxu0 0
  %171 = vmatprep.subr.bf16.mxu0 0
  %172 = vmatpush1.bf16.msra.mxu0 0
  %173 = vmatprep.subr.bf16.mxu0 0
  %174 = vmatpush1.bf16.msra.mxu0 0
  %175 = vmatprep.subr.bf16.mxu0 0
  %176 = vmatpush1.bf16.msra.mxu0 0
  %177 = vmatprep.subr.bf16.mxu0 0
  %178 = vmatpush1.bf16.msra.mxu0 0
  %179 = vmatprep.subr.bf16.mxu0 0
  %180 = vmatpush1.bf16.msra.mxu0 0
  %181 = vmatprep.mubr.bf16.mxu0 0
  %182 = vmatmul.mubr.bf16.gmra.mrb[0].mxu0 %v147
  %v183 = vpop.f32.mrb[0].mxu0
  %v184 = vadd.f32 %v137, %v183
  %v185 = vpop.f32.mrb[0].mxu0
  %v186 = vpop.f32.mrb[0].mxu0
  %v187 = vpop.f32.mrb[0].mxu0
  %188 = vdwg.mxu0
  %v189 = vmax.f32 %v184, 0.0
  %v190 = vpack.c.bf16 %v189, %v189
  %vm191 = vcmask 519168
  %192 = vst.msk [vmem:[%s10] sm:$0xf] %vm191, %v190
  %v193 = vld [vmem:[%s6] sm:$0x1]
  %v194 = vld [vmem:[%s7] sm:$0xf]
  %v195 = vld [vmem:[%s7 + $0x4] sm:$0xf]
  %v196 = vld [vmem:[%s7 + $0x8] sm:$0xf]
  %v197 = vld [vmem:[%s7 + $0xc] sm:$0xf]
  %v198 = vld [vmem:[%s8] sm:$0x1]
  %v200 = vlaneseq
  %v201 = vshrl.u32 %v200, 7
  %v202 = vsub.s32 0, %v201
  %v203 = vrot.slane %v198, %v202
  %v209 = vunpack.c.l.b16 %v194
  %v210 = vunpack.c.l.b16 %v195
  %v211 = vunpack.c.l.b16 %v196
  %v212 = vunpack.c.l.b16 %v197
  %v213 = vpack.c.b16 %v210, %v209
  %v214 = vpack.c.b16 %v212, %v211
  %vm217 = vcmask 261120
  %v219 = vsel %vm217, %v193, 0
  %221 = vmatprep.subr.bf16.mxu0 0
  %222 = vmatpush1.bf16.msra.mxu0 %v213
  %223 = vmatprep.subr.bf16.mxu0 0
  %224 = vmatpush1.bf16.msra.mxu0 %v214
  %225 = vmatprep.subr.bf16.mxu0 0
  %226 = vmatpush1.bf16.msra.mxu0 0
  %227 = vmatprep.subr.bf16.mxu0 0
  %228 = vmatpush1.bf16.msra.mxu0 0
  %229 = vmatprep.subr.bf16.mxu0 0
  %230 = vmatpush1.bf16.msra.mxu0 0
  %231 = vmatprep.subr.bf16.mxu0 0
  %232 = vmatpush1.bf16.msra.mxu0 0
  %233 = vmatprep.subr.bf16.mxu0 0
  %234 = vmatpush1.bf16.msra.mxu0 0
  %235 = vmatprep.subr.bf16.mxu0 0
  %236 = vmatpush1.bf16.msra.mxu0 0
  %237 = vmatprep.subr.bf16.mxu0 0
  %238 = vmatpush1.bf16.msra.mxu0 0
  %239 = vmatprep.subr.bf16.mxu0 0
  %240 = vmatpush1.bf16.msra.mxu0 0
  %241 = vmatprep.subr.bf16.mxu0 0
  %242 = vmatpush1.bf16.msra.mxu0 0
  %243 = vmatprep.subr.bf16.mxu0 0
  %244 = vmatpush1.bf16.msra.mxu0 0
  %245 = vmatprep.subr.bf16.mxu0 0
  %246 = vmatpush1.bf16.msra.mxu0 0
  %247 = vmatprep.subr.bf16.mxu0 0
  %248 = vmatpush1.bf16.msra.mxu0 0
  %249 = vmatprep.subr.bf16.mxu0 0
  %250 = vmatpush1.bf16.msra.mxu0 0
  %251 = vmatprep.subr.bf16.mxu0 0
  %252 = vmatpush1.bf16.msra.mxu0 0
  %253 = vmatprep.mubr.bf16.mxu0 0
  %254 = vmatmul.mubr.bf16.gmra.mrb[0].mxu0 %v219
  %v255 = vpop.f32.mrb[0].mxu0
  %v256 = vadd.f32 %v203, %v255
  %v257 = vpop.f32.mrb[0].mxu0
  %v258 = vpop.f32.mrb[0].mxu0
  %v259 = vpop.f32.mrb[0].mxu0
  %260 = vdwg.mxu0
  %v261 = vmax.f32 %v256, 0.0
  %v262 = vpack.c.bf16 %v261, %v261
  %263 = vst [vmem:[%s11] sm:$0x1] %v262
  // Predicated region
  $region38: #{_lambda_.12} parent=0 // pred_check
    _
  $region39: #{_lambda_.12} parent=0 // pred_check_branch
    %265 = sbr.rel (0) target = $region41
  $region40: #{_lambda_.12} parent=0 // pred_region
    _
  $region41: #{_lambda_.12} parent=0 // pred_fallthru
    _
  // Predicated region
  $region42: #{_lambda_.12} parent=0 // pred_check
    _
  $region43: #{_lambda_.12} parent=0 // pred_check_branch
    %267 = sbr.rel (0) target = $region45
  $region44: #{_lambda_.12} parent=0 // pred_region
    _
  $region45: #{_lambda_.12} parent=0 // pred_fallthru
    _
  // Predicated region
  $region46: #{_lambda_.12} parent=0 // pred_check
    _
  $region47: #{_lambda_.12} parent=0 // pred_check_branch
    %269 = sbr.rel (0) target = $region49
  $region48: #{_lambda_.12} parent=0 // pred_region
    _
  $region49: #{_lambda_.12} parent=0 // pred_fallthru
    _
  // Predicated region
  $region50: #{_lambda_.12} parent=0 // pred_check
    _
  $region51: #{_lambda_.12} parent=0 // pred_check_branch
    %271 = sbr.rel (0) target = $region53
  $region52: #{_lambda_.12} parent=0 // pred_region
    _
  $region53: #{_lambda_.12} parent=0 // pred_fallthru
    _
  // Predicated region
  $region54: #{_lambda_.12} parent=0 // pred_check
    _
  $region55: #{_lambda_.12} parent=0 // pred_check_branch
    %273 = sbr.rel (0) target = $region57
  $region56: #{_lambda_.12} parent=0 // pred_region
    _
  $region57: #{_lambda_.12} parent=0 // pred_fallthru
    _
  // Predicated region
  $region58: #{_lambda_.12} parent=0 // pred_check
    _
  $region59: #{_lambda_.12} parent=0 // pred_check_branch
    %275 = sbr.rel (0) target = $region61
  $region60: #{_lambda_.12} parent=0 // pred_region
    _
  $region61: #{_lambda_.12} parent=0 // pred_fallthru
    _

// kernel: _lambda_.13
$region0: #{_lambda_.13}
  #allocation0 [shape = 'u32[]', space=smem, size = 0x4, offset = 0x4, fixed_abs, tag = 'smem constant byte address 0x4 - core index']
  #allocation1 [shape = 'u32[144,128]{1,0:T(1,128)}', space=vmem, size = 0x12000, scoped, tag = 'internal scratch']
  %s0 = inlined_call_operand.vmem [shape: bf16[2,256], index: 0, kind: input, shape index: {}]
  %s1 = inlined_call_operand.vmem [shape: bf16[2,256], index: 1, kind: input, shape index: {}]
  %s2 = inlined_call_operand.vmem [shape: bf16[256,128], index: 2, kind: input, shape index: {}]
  %s3 = inlined_call_operand.vmem [shape: f32[1,128], index: 3, kind: input, shape index: {}]
  %s4 = inlined_call_operand.vmem [shape: bf16[256,384], index: 4, kind: input, shape index: {}]
  %s5 = inlined_call_operand.vmem [shape: f32[1,384], index: 5, kind: input, shape index: {}]
  %s6 = inlined_call_operand.vmem [shape: f32[2,512], index: 6, kind: output, shape index: {}]
  %s7 = sld [smem:[#allocation0]]
  $region34: #{_lambda_.13} parent=0
    _
  %s9 = ssub.s32 1, %s7
  %s10 = scalar_select 0, %s9, %s7
  // Predicated region
  $region2: #{_lambda_.13} parent=0 // pred_check
    _
  $region3: #{_lambda_.13} parent=0 // pred_check_branch
    %12 = sbr.rel (0) target = $region5
  $region4: #{_lambda_.13} parent=0 // pred_region
    _
  $region5: #{_lambda_.13} parent=0 // pred_fallthru
    _
  // Predicated region
  $region6: #{_lambda_.13} parent=0 // pred_check
    _
  $region7: #{_lambda_.13} parent=0 // pred_check_branch
    %14 = sbr.rel (0) target = $region9
  $region8: #{_lambda_.13} parent=0 // pred_region
    _
  $region9: #{_lambda_.13} parent=0 // pred_fallthru
    _
  // Predicated region
  $region10: #{_lambda_.13} parent=0 // pred_check
    _
  $region11: #{_lambda_.13} parent=0 // pred_check_branch
    %16 = sbr.rel (0) target = $region13
  $region12: #{_lambda_.13} parent=0 // pred_region
    _
  $region13: #{_lambda_.13} parent=0 // pred_fallthru
    _
  // Predicated region
  $region14: #{_lambda_.13} parent=0 // pred_check
    _
  $region15: #{_lambda_.13} parent=0 // pred_check_branch
    %18 = sbr.rel (0) target = $region17
  $region16: #{_lambda_.13} parent=0 // pred_region
    _
  $region17: #{_lambda_.13} parent=0 // pred_fallthru
    _
  // Predicated region
  $region18: #{_lambda_.13} parent=0 // pred_check
    _
  $region19: #{_lambda_.13} parent=0 // pred_check_branch
    %20 = sbr.rel (0) target = $region21
  $region20: #{_lambda_.13} parent=0 // pred_region
    _
  $region21: #{_lambda_.13} parent=0 // pred_fallthru
    _
  // Predicated region
  $region22: #{_lambda_.13} parent=0 // pred_check
    _
  $region23: #{_lambda_.13} parent=0 // pred_check_branch
    %22 = sbr.rel (0) target = $region25
  $region24: #{_lambda_.13} parent=0 // pred_region
    _
  $region25: #{_lambda_.13} parent=0 // pred_fallthru
    _
  %v24 = vld [vmem:[%s0] sm:$0x3]
  %v25 = vld [vmem:[%s2] sm:$0xf]
  %v26 = vld [vmem:[%s2 + $0x4] sm:$0xf]
  %v27 = vld [vmem:[%s2 + $0x8] sm:$0xf]
  %v28 = vld [vmem:[%s2 + $0xc] sm:$0xf]
  %v29 = vld [vmem:[%s2 + $0x10] sm:$0xf]
  %v30 = vld [vmem:[%s2 + $0x14] sm:$0xf]
  %v31 = vld [vmem:[%s2 + $0x18] sm:$0xf]
  %v32 = vld [vmem:[%s2 + $0x1c] sm:$0xf]
  %v33 = vld [vmem:[%s2 + $0x20] sm:$0xf]
  %v34 = vld [vmem:[%s2 + $0x24] sm:$0xf]
  %v35 = vld [vmem:[%s2 + $0x28] sm:$0xf]
  %v36 = vld [vmem:[%s2 + $0x2c] sm:$0xf]
  %v37 = vld [vmem:[%s2 + $0x30] sm:$0xf]
  %v38 = vld [vmem:[%s2 + $0x34] sm:$0xf]
  %v39 = vld [vmem:[%s2 + $0x38] sm:$0xf]
  %v40 = vld [vmem:[%s2 + $0x3c] sm:$0xf]
  %v41 = vld [vmem:[%s2 + $0x40] sm:$0xf]
  %v42 = vld [vmem:[%s2 + $0x44] sm:$0xf]
  %v43 = vld [vmem:[%s2 + $0x48] sm:$0xf]
  %v44 = vld [vmem:[%s2 + $0x4c] sm:$0xf]
  %v45 = vld [vmem:[%s2 + $0x50] sm:$0xf]
  %v46 = vld [vmem:[%s2 + $0x54] sm:$0xf]
  %v47 = vld [vmem:[%s2 + $0x58] sm:$0xf]
  %v48 = vld [vmem:[%s2 + $0x5c] sm:$0xf]
  %v49 = vld [vmem:[%s2 + $0x60] sm:$0xf]
  %v50 = vld [vmem:[%s2 + $0x64] sm:$0xf]
  %v51 = vld [vmem:[%s2 + $0x68] sm:$0xf]
  %v52 = vld [vmem:[%s2 + $0x6c] sm:$0xf]
  %v53 = vld [vmem:[%s2 + $0x70] sm:$0xf]
  %v54 = vld [vmem:[%s2 + $0x74] sm:$0xf]
  %v55 = vld [vmem:[%s2 + $0x78] sm:$0xf]
  %v56 = vld [vmem:[%s2 + $0x7c] sm:$0xf]
  %v57 = vld [vmem:[%s3] sm:$0x1]
  %v59 = vlaneseq
  %v60 = vshrl.u32 %v59, 7
  %v61 = vsub.s32 0, %v60
  %v62 = vrot.slane %v57, %v61
  %v66 = vunpack.c.l.s4 1966171168
  %v67 = vunpack.c.0.s8 %v66
  %v68 = vlaneseq
  %v69 = vshrl.u32 %v68, 7
  %v70 = vsub.s32 %v67, %v69
  %v71 = vrot.slane %v24, %v70
  %v72 = vcombine.high %v71, %v71
  %v74 = vunpack.c.l.s4 1966171168
  %v75 = vunpack.c.0.s8 %v74
  %v76 = vlaneseq
  %v77 = vshrl.u32 %v76, 7
  %v78 = vsub.s32 %v75, %v77
  %v79 = vrot.slane %v71, %v78
  %v81 = vunpack.c.l.s4 1966171168
  %v82 = vunpack.c.0.s8 %v81
  %v83 = vlaneseq
  %v84 = vshrl.u32 %v83, 7
  %v85 = vsub.s32 %v82, %v84
  %v86 = vrot.slane %v72, %v85
  %v121 = vunpack.c.l.b16 %v25
  %v122 = vunpack.c.l.b16 %v26
  %v123 = vunpack.c.l.b16 %v27
  %v124 = vunpack.c.l.b16 %v28
  %v125 = vunpack.c.l.b16 %v29
  %v126 = vunpack.c.l.b16 %v30
  %v127 = vunpack.c.l.b16 %v31
  %v128 = vunpack.c.l.b16 %v32
  %v129 = vunpack.c.l.b16 %v33
  %v130 = vunpack.c.l.b16 %v34
  %v131 = vunpack.c.l.b16 %v35
  %v132 = vunpack.c.l.b16 %v36
  %v133 = vunpack.c.l.b16 %v37
  %v134 = vunpack.c.l.b16 %v38
  %v135 = vunpack.c.l.b16 %v39
  %v136 = vunpack.c.l.b16 %v40
  %v137 = vunpack.c.l.b16 %v41
  %v138 = vunpack.c.l.b16 %v42
  %v139 = vunpack.c.l.b16 %v43
  %v140 = vunpack.c.l.b16 %v44
  %v141 = vunpack.c.l.b16 %v45
  %v142 = vunpack.c.l.b16 %v46
  %v143 = vunpack.c.l.b16 %v47
  %v144 = vunpack.c.l.b16 %v48
  %v145 = vunpack.c.l.b16 %v49
  %v146 = vunpack.c.l.b16 %v50
  %v147 = vunpack.c.l.b16 %v51
  %v148 = vunpack.c.l.b16 %v52
  %v149 = vunpack.c.l.b16 %v53
  %v150 = vunpack.c.l.b16 %v54
  %v151 = vunpack.c.l.b16 %v55
  %v152 = vunpack.c.l.b16 %v56
  %v153 = vpack.c.b16 %v122, %v121
  %v154 = vpack.c.b16 %v124, %v123
  %v155 = vpack.c.b16 %v126, %v125
  %v156 = vpack.c.b16 %v128, %v127
  %v157 = vpack.c.b16 %v130, %v129
  %v158 = vpack.c.b16 %v132, %v131
  %v159 = vpack.c.b16 %v134, %v133
  %v160 = vpack.c.b16 %v136, %v135
  %v161 = vpack.c.b16 %v138, %v137
  %v162 = vpack.c.b16 %v140, %v139
  %v163 = vpack.c.b16 %v142, %v141
  %v164 = vpack.c.b16 %v144, %v143
  %v165 = vpack.c.b16 %v146, %v145
  %v166 = vpack.c.b16 %v148, %v147
  %v167 = vpack.c.b16 %v150, %v149
  %v168 = vpack.c.b16 %v152, %v151
  %185 = vmatprep.subr.bf16.mxu0 0
  %186 = vmatpush1.bf16.msra.mxu0 %v153
  %187 = vmatprep.subr.bf16.mxu0 0
  %188 = vmatpush1.bf16.msra.mxu0 %v154
  %189 = vmatprep.subr.bf16.mxu0 0
  %190 = vmatpush1.bf16.msra.mxu0 %v155
  %191 = vmatprep.subr.bf16.mxu0 0
  %192 = vmatpush1.bf16.msra.mxu0 %v156
  %193 = vmatprep.subr.bf16.mxu0 0
  %194 = vmatpush1.bf16.msra.mxu0 %v157
  %195 = vmatprep.subr.bf16.mxu0 0
  %196 = vmatpush1.bf16.msra.mxu0 %v158
  %197 = vmatprep.subr.bf16.mxu0 0
  %198 = vmatpush1.bf16.msra.mxu0 %v159
  %199 = vmatprep.subr.bf16.mxu0 0
  %200 = vmatpush1.bf16.msra.mxu0 %v160
  %201 = vmatprep.subr.bf16.mxu0 0
  %202 = vmatpush1.bf16.msra.mxu0 %v161
  %203 = vmatprep.subr.bf16.mxu0 0
  %204 = vmatpush1.bf16.msra.mxu0 %v162
  %205 = vmatprep.subr.bf16.mxu0 0
  %206 = vmatpush1.bf16.msra.mxu0 %v163
  %207 = vmatprep.subr.bf16.mxu0 0
  %208 = vmatpush1.bf16.msra.mxu0 %v164
  %209 = vmatprep.subr.bf16.mxu0 0
  %210 = vmatpush1.bf16.msra.mxu0 %v165
  %211 = vmatprep.subr.bf16.mxu0 0
  %212 = vmatpush1.bf16.msra.mxu0 %v166
  %213 = vmatprep.subr.bf16.mxu0 0
  %214 = vmatpush1.bf16.msra.mxu0 %v167
  %215 = vmatprep.subr.bf16.mxu0 0
  %216 = vmatpush1.bf16.msra.mxu0 %v168
  %217 = vmatprep.mubr.bf16.mxu0 %v86
  %218 = vmatmul.mubr.bf16.gmra.mrb[0].mxu0 %v79
  %v219 = vpop.f32.mrb[0].mxu0
  %v220 = vadd.f32 %v62, %v219
  %v221 = vpop.f32.mrb[0].mxu0
  %v222 = vpop.f32.mrb[0].mxu0
  %v223 = vpop.f32.mrb[0].mxu0
  %224 = vdwg.mxu0
  %v225 = vld [vmem:[%s1] sm:$0x3]
  %v226 = vld [vmem:[%s4] sm:$0xff]
  %v227 = vld [vmem:[%s4 + $0x8] sm:$0xf]
  %v228 = vld [vmem:[%s4 + $0xc] sm:$0xff]
  %v229 = vld [vmem:[%s4 + $0x14] sm:$0xf]
  %v230 = vld [vmem:[%s4 + $0x18] sm:$0xff]
  %v231 = vld [vmem:[%s4 + $0x20] sm:$0xf]
  %v232 = vld [vmem:[%s4 + $0x24] sm:$0xff]
  %v233 = vld [vmem:[%s4 + $0x2c] sm:$0xf]
  %v234 = vld [vmem:[%s4 + $0x30] sm:$0xff]
  %v235 = vld [vmem:[%s4 + $0x38] sm:$0xf]
  %v236 = vld [vmem:[%s4 + $0x3c] sm:$0xff]
  %v237 = vld [vmem:[%s4 + $0x44] sm:$0xf]
  %v238 = vld [vmem:[%s4 + $0x48] sm:$0xff]
  %v239 = vld [vmem:[%s4 + $0x50] sm:$0xf]
  %v240 = vld [vmem:[%s4 + $0x54] sm:$0xff]
  %v241 = vld [vmem:[%s4 + $0x5c] sm:$0xf]
  %v242 = vld [vmem:[%s4 + $0x60] sm:$0xff]
  %v243 = vld [vmem:[%s4 + $0x68] sm:$0xf]
  %v244 = vld [vmem:[%s4 + $0x6c] sm:$0xff]
  %v245 = vld [vmem:[%s4 + $0x74] sm:$0xf]
  %v246 = vld [vmem:[%s4 + $0x78] sm:$0xff]
  %v247 = vld [vmem:[%s4 + $0x80] sm:$0xf]
  %v248 = vld [vmem:[%s4 + $0x84] sm:$0xff]
  %v249 = vld [vmem:[%s4 + $0x8c] sm:$0xf]
  %v250 = vld [vmem:[%s4 + $0x90] sm:$0xff]
  %v251 = vld [vmem:[%s4 + $0x98] sm:$0xf]
  %v252 = vld [vmem:[%s4 + $0x9c] sm:$0xff]
  %v253 = vld [vmem:[%s4 + $0xa4] sm:$0xf]
  %v254 = vld [vmem:[%s4 + $0xa8] sm:$0xff]
  %v255 = vld [vmem:[%s4 + $0xb0] sm:$0xf]
  %v256 = vld [vmem:[%s4 + $0xb4] sm:$0xff]
  %v257 = vld [vmem:[%s4 + $0xbc] sm:$0xf]
  %v258 = vld [vmem:[%s4 + $0xc0] sm:$0xff]
  %v259 = vld [vmem:[%s4 + $0xc8] sm:$0xf]
  %v260 = vld [vmem:[%s4 + $0xcc] sm:$0xff]
  %v261 = vld [vmem:[%s4 + $0xd4] sm:$0xf]
  %v262 = vld [vmem:[%s4 + $0xd8] sm:$0xff]
  %v263 = vld [vmem:[%s4 + $0xe0] sm:$0xf]
  %v264 = vld [vmem:[%s4 + $0xe4] sm:$0xff]
  %v265 = vld [vmem:[%s4 + $0xec] sm:$0xf]
  %v266 = vld [vmem:[%s4 + $0xf0] sm:$0xff]
  %v267 = vld [vmem:[%s4 + $0xf8] sm:$0xf]
  %v268 = vld [vmem:[%s4 + $0xfc] sm:$0xff]
  %v269 = vld [vmem:[%s4 + $0x104] sm:$0xf]
  %v270 = vld [vmem:[%s4 + $0x108] sm:$0xff]
  %v271 = vld [vmem:[%s4 + $0x110] sm:$0xf]
  %v272 = vld [vmem:[%s4 + $0x114] sm:$0xff]
  %v273 = vld [vmem:[%s4 + $0x11c] sm:$0xf]
  %v274 = vld [vmem:[%s4 + $0x120] sm:$0xff]
  %v275 = vld [vmem:[%s4 + $0x128] sm:$0xf]
  %v276 = vld [vmem:[%s4 + $0x12c] sm:$0xff]
  %v277 = vld [vmem:[%s4 + $0x134] sm:$0xf]
  %v278 = vld [vmem:[%s4 + $0x138] sm:$0xff]
  %v279 = vld [vmem:[%s4 + $0x140] sm:$0xf]
  %v280 = vld [vmem:[%s4 + $0x144] sm:$0xff]
  %v281 = vld [vmem:[%s4 + $0x14c] sm:$0xf]
  %v282 = vld [vmem:[%s4 + $0x150] sm:$0xff]
  %v283 = vld [vmem:[%s4 + $0x158] sm:$0xf]
  %v284 = vld [vmem:[%s4 + $0x15c] sm:$0xff]
  %v285 = vld [vmem:[%s4 + $0x164] sm:$0xf]
  %v286 = vld [vmem:[%s4 + $0x168] sm:$0xff]
  %v287 = vld [vmem:[%s4 + $0x170] sm:$0xf]
  %v288 = vld [vmem:[%s4 + $0x174] sm:$0xff]
  %v289 = vld [vmem:[%s4 + $0x17c] sm:$0xf]
  %v290 = vld [vmem:[%s5] sm:$0x7]
  %v292 = vlaneseq
  %v293 = vshrl.u32 %v292, 7
  %v294 = vsub.s32 0, %v293
  %v295 = vrot.slane %v290, %v294
  %v296 = vlaneseq
  %v297 = vshrl.u32 %v296, 7
  %v298 = vsub.s32 1, %v297
  %v299 = vrot.slane %v290, %v298
  %v300 = vlaneseq
  %v301 = vshrl.u32 %v300, 7
  %v302 = vsub.s32 2, %v301
  %v303 = vrot.slane %v290, %v302
  %v309 = vunpack.c.l.s4 1966171168
  %v310 = vunpack.c.0.s8 %v309
  %v311 = vlaneseq
  %v312 = vshrl.u32 %v311, 7
  %v313 = vsub.s32 %v310, %v312
  %v314 = vrot.slane %v225, %v313
  %v315 = vcombine.high %v314, %v314
  %v317 = vunpack.c.l.s4 1966171168
  %v318 = vunpack.c.0.s8 %v317
  %v319 = vlaneseq
  %v320 = vshrl.u32 %v319, 7
  %v321 = vsub.s32 %v318, %v320
  %v322 = vrot.slane %v314, %v321
  %v324 = vunpack.c.l.s4 1966171168
  %v325 = vunpack.c.0.s8 %v324
  %v326 = vlaneseq
  %v327 = vshrl.u32 %v326, 7
  %v328 = vsub.s32 %v325, %v327
  %v329 = vrot.slane %v315, %v328
  %v396 = vunpack.c.l.b16 %v226
  %v397 = vunpack.c.h.b16 %v226
  %v398 = vunpack.c.l.b16 %v227
  %v399 = vunpack.c.l.b16 %v228
  %v400 = vunpack.c.h.b16 %v228
  %v401 = vunpack.c.l.b16 %v229
  %v402 = vunpack.c.l.b16 %v230
  %v403 = vunpack.c.h.b16 %v230
  %v404 = vunpack.c.l.b16 %v231
  %v405 = vunpack.c.l.b16 %v232
  %v406 = vunpack.c.h.b16 %v232
  %v407 = vunpack.c.l.b16 %v233
  %v408 = vunpack.c.l.b16 %v234
  %v409 = vunpack.c.h.b16 %v234
  %v410 = vunpack.c.l.b16 %v235
  %v411 = vunpack.c.l.b16 %v236
  %v412 = vunpack.c.h.b16 %v236
  %v413 = vunpack.c.l.b16 %v237
  %v414 = vunpack.c.l.b16 %v238
  %v415 = vunpack.c.h.b16 %v238
  %v416 = vunpack.c.l.b16 %v239
  %v417 = vunpack.c.l.b16 %v240
  %v418 = vunpack.c.h.b16 %v240
  %v419 = vunpack.c.l.b16 %v241
  %v420 = vunpack.c.l.b16 %v242
  %v421 = vunpack.c.h.b16 %v242
  %v422 = vunpack.c.l.b16 %v243
  %v423 = vunpack.c.l.b16 %v244
  %v424 = vunpack.c.h.b16 %v244
  %v425 = vunpack.c.l.b16 %v245
  %v426 = vunpack.c.l.b16 %v246
  %v427 = vunpack.c.h.b16 %v246
  %v428 = vunpack.c.l.b16 %v247
  %v429 = vunpack.c.l.b16 %v248
  %v430 = vunpack.c.h.b16 %v248
  %v431 = vunpack.c.l.b16 %v249
  %v432 = vunpack.c.l.b16 %v250
  %v433 = vunpack.c.h.b16 %v250
  %v434 = vunpack.c.l.b16 %v251
  %v435 = vunpack.c.l.b16 %v252
  %v436 = vunpack.c.h.b16 %v252
  %v437 = vunpack.c.l.b16 %v253
  %v438 = vunpack.c.l.b16 %v254
  %v439 = vunpack.c.h.b16 %v254
  %v440 = vunpack.c.l.b16 %v255
  %v441 = vunpack.c.l.b16 %v256
  %v442 = vunpack.c.h.b16 %v256
  %v443 = vunpack.c.l.b16 %v257
  %v444 = vunpack.c.l.b16 %v258
  %v445 = vunpack.c.h.b16 %v258
  %v446 = vunpack.c.l.b16 %v259
  %v447 = vunpack.c.l.b16 %v260
  %v448 = vunpack.c.h.b16 %v260
  %v449 = vunpack.c.l.b16 %v261
  %v450 = vunpack.c.l.b16 %v262
  %v451 = vunpack.c.h.b16 %v262
  %v452 = vunpack.c.l.b16 %v263
  %v453 = vunpack.c.l.b16 %v264
  %v454 = vunpack.c.h.b16 %v264
  %v455 = vunpack.c.l.b16 %v265
  %v456 = vunpack.c.l.b16 %v266
  %v457 = vunpack.c.h.b16 %v266
  %v458 = vunpack.c.l.b16 %v267
  %v459 = vunpack.c.l.b16 %v268
  %v460 = vunpack.c.h.b16 %v268
  %v461 = vunpack.c.l.b16 %v269
  %v462 = vunpack.c.l.b16 %v270
  %v463 = vunpack.c.h.b16 %v270
  %v464 = vunpack.c.l.b16 %v271
  %v465 = vunpack.c.l.b16 %v272
  %v466 = vunpack.c.h.b16 %v272
  %v467 = vunpack.c.l.b16 %v273
  %v468 = vunpack.c.l.b16 %v274
  %v469 = vunpack.c.h.b16 %v274
  %v470 = vunpack.c.l.b16 %v275
  %v471 = vunpack.c.l.b16 %v276
  %v472 = vunpack.c.h.b16 %v276
  %v473 = vunpack.c.l.b16 %v277
  %v474 = vunpack.c.l.b16 %v278
  %v475 = vunpack.c.h.b16 %v278
  %v476 = vunpack.c.l.b16 %v279
  %v477 = vunpack.c.l.b16 %v280
  %v478 = vunpack.c.h.b16 %v280
  %v479 = vunpack.c.l.b16 %v281
  %v480 = vunpack.c.l.b16 %v282
  %v481 = vunpack.c.h.b16 %v282
  %v482 = vunpack.c.l.b16 %v283
  %v483 = vunpack.c.l.b16 %v284
  %v484 = vunpack.c.h.b16 %v284
  %v485 = vunpack.c.l.b16 %v285
  %v486 = vunpack.c.l.b16 %v286
  %v487 = vunpack.c.h.b16 %v286
  %v488 = vunpack.c.l.b16 %v287
  %v489 = vunpack.c.l.b16 %v288
  %v490 = vunpack.c.h.b16 %v288
  %v491 = vunpack.c.l.b16 %v289
  %v492 = vpack.c.b16 %v399, %v396
  %v493 = vpack.c.b16 %v400, %v397
  %v494 = vpack.c.b16 %v401, %v398
  %v495 = vpack.c.b16 %v405, %v402
  %v496 = vpack.c.b16 %v406, %v403
  %v497 = vpack.c.b16 %v407, %v404
  %v498 = vpack.c.b16 %v411, %v408
  %v499 = vpack.c.b16 %v412, %v409
  %v500 = vpack.c.b16 %v413, %v410
  %v501 = vpack.c.b16 %v417, %v414
  %v502 = vpack.c.b16 %v418, %v415
  %v503 = vpack.c.b16 %v419, %v416
  %v504 = vpack.c.b16 %v423, %v420
  %v505 = vpack.c.b16 %v424, %v421
  %v506 = vpack.c.b16 %v425, %v422
  %v507 = vpack.c.b16 %v429, %v426
  %v508 = vpack.c.b16 %v430, %v427
  %v509 = vpack.c.b16 %v431, %v428
  %v510 = vpack.c.b16 %v435, %v432
  %v511 = vpack.c.b16 %v436, %v433
  %v512 = vpack.c.b16 %v437, %v434
  %v513 = vpack.c.b16 %v441, %v438
  %v514 = vpack.c.b16 %v442, %v439
  %v515 = vpack.c.b16 %v443, %v440
  %v516 = vpack.c.b16 %v447, %v444
  %v517 = vpack.c.b16 %v448, %v445
  %v518 = vpack.c.b16 %v449, %v446
  %v519 = vpack.c.b16 %v453, %v450
  %v520 = vpack.c.b16 %v454, %v451
  %v521 = vpack.c.b16 %v455, %v452
  %v522 = vpack.c.b16 %v459, %v456
  %v523 = vpack.c.b16 %v460, %v457
  %v524 = vpack.c.b16 %v461, %v458
  %v525 = vpack.c.b16 %v465, %v462
  %v526 = vpack.c.b16 %v466, %v463
  %v527 = vpack.c.b16 %v467, %v464
  %v528 = vpack.c.b16 %v471, %v468
  %v529 = vpack.c.b16 %v472, %v469
  %v530 = vpack.c.b16 %v473, %v470
  %v531 = vpack.c.b16 %v477, %v474
  %v532 = vpack.c.b16 %v478, %v475
  %v533 = vpack.c.b16 %v479, %v476
  %v534 = vpack.c.b16 %v483, %v480
  %v535 = vpack.c.b16 %v484, %v481
  %v536 = vpack.c.b16 %v485, %v482
  %v537 = vpack.c.b16 %v489, %v486
  %v538 = vpack.c.b16 %v490, %v487
  %v539 = vpack.c.b16 %v491, %v488
  %588 = vmatprep.subr.bf16.mxu0 %v493
  %589 = vmatpush1.bf16.msra.mxu0 %v492
  %590 = vmatprep.subr.bf16.mxu0 %v496
  %591 = vmatpush1.bf16.msra.mxu0 %v495
  %592 = vmatprep.subr.bf16.mxu0 %v499
  %593 = vmatpush1.bf16.msra.mxu0 %v498
  %594 = vmatprep.subr.bf16.mxu0 %v502
  %595 = vmatpush1.bf16.msra.mxu0 %v501
  %596 = vmatprep.subr.bf16.mxu0 %v505
  %597 = vmatpush1.bf16.msra.mxu0 %v504
  %598 = vmatprep.subr.bf16.mxu0 %v508
  %599 = vmatpush1.bf16.msra.mxu0 %v507
  %600 = vmatprep.subr.bf16.mxu0 %v511
  %601 = vmatpush1.bf16.msra.mxu0 %v510
  %602 = vmatprep.subr.bf16.mxu0 %v514
  %603 = vmatpush1.bf16.msra.mxu0 %v513
  %604 = vmatprep.subr.bf16.mxu0 %v517
  %605 = vmatpush1.bf16.msra.mxu0 %v516
  %606 = vmatprep.subr.bf16.mxu0 %v520
  %607 = vmatpush1.bf16.msra.mxu0 %v519
  %608 = vmatprep.subr.bf16.mxu0 %v523
  %609 = vmatpush1.bf16.msra.mxu0 %v522
  %610 = vmatprep.subr.bf16.mxu0 %v526
  %611 = vmatpush1.bf16.msra.mxu0 %v525
  %612 = vmatprep.subr.bf16.mxu0 %v529
  %613 = vmatpush1.bf16.msra.mxu0 %v528
  %614 = vmatprep.subr.bf16.mxu0 %v532
  %615 = vmatpush1.bf16.msra.mxu0 %v531
  %616 = vmatprep.subr.bf16.mxu0 %v535
  %617 = vmatpush1.bf16.msra.mxu0 %v534
  %618 = vmatprep.subr.bf16.mxu0 %v538
  %619 = vmatpush1.bf16.msra.mxu0 %v537
  %620 = vmatprep.mubr.bf16.mxu0 %v329
  %621 = vmatmul.mubr.bf16.gmra.mrb[0].mxu0 %v322
  %v622 = vpop.f32.mrb[0].mxu0
  %v623 = vadd.f32 %v295, %v622
  %v624 = vpop.f32.mrb[0].mxu0
  %v625 = vadd.f32 %v299, %v624
  %v626 = vpop.f32.mrb[0].mxu0
  %v627 = vpop.f32.mrb[0].mxu0
  %628 = vdwg.mxu0
  %629 = vmatprep.subr.bf16.mxu0 0
  %630 = vmatpush1.bf16.msra.mxu0 %v494
  %631 = vmatprep.subr.bf16.mxu0 0
  %632 = vmatpush1.bf16.msra.mxu0 %v497
  %633 = vmatprep.subr.bf16.mxu0 0
  %634 = vmatpush1.bf16.msra.mxu0 %v500
  %635 = vmatprep.subr.bf16.mxu0 0
  %636 = vmatpush1.bf16.msra.mxu0 %v503
  %637 = vmatprep.subr.bf16.mxu0 0
  %638 = vmatpush1.bf16.msra.mxu0 %v506
  %639 = vmatprep.subr.bf16.mxu0 0
  %640 = vmatpush1.bf16.msra.mxu0 %v509
  %641 = vmatprep.subr.bf16.mxu0 0
  %642 = vmatpush1.bf16.msra.mxu0 %v512
  %643 = vmatprep.subr.bf16.mxu0 0
  %644 = vmatpush1.bf16.msra.mxu0 %v515
  %645 = vmatprep.subr.bf16.mxu0 0
  %646 = vmatpush1.bf16.msra.mxu0 %v518
  %647 = vmatprep.subr.bf16.mxu0 0
  %648 = vmatpush1.bf16.msra.mxu0 %v521
  %649 = vmatprep.subr.bf16.mxu0 0
  %650 = vmatpush1.bf16.msra.mxu0 %v524
  %651 = vmatprep.subr.bf16.mxu0 0
  %652 = vmatpush1.bf16.msra.mxu0 %v527
  %653 = vmatprep.subr.bf16.mxu0 0
  %654 = vmatpush1.bf16.msra.mxu0 %v530
  %655 = vmatprep.subr.bf16.mxu0 0
  %656 = vmatpush1.bf16.msra.mxu0 %v533
  %657 = vmatprep.subr.bf16.mxu0 0
  %658 = vmatpush1.bf16.msra.mxu0 %v536
  %659 = vmatprep.subr.bf16.mxu0 0
  %660 = vmatpush1.bf16.msra.mxu0 %v539
  %661 = vmatprep.mubr.bf16.mxu0 %v329
  %662 = vmatmul.mubr.bf16.gmra.mrb[0].mxu0 %v322
  %v663 = vpop.f32.mrb[0].mxu0
  %v664 = vadd.f32 %v303, %v663
  %v665 = vpop.f32.mrb[0].mxu0
  %v666 = vpop.f32.mrb[0].mxu0
  %v667 = vpop.f32.mrb[0].mxu0
  %668 = vdwg.mxu0
  %vm669 = vcmask 1041408
  %v670 = vsel %vm669, %v623, -inf
  %671 = vmax.xlane.f32.xlu0 %v670
  %v672 = vpop.xlane.xlu0 %671
  %v673 = vsub.f32 %v623, %v672
  %v674 = vmul.f32 %v673, 1.442695
  %v675 = vpow.pop %v674
  %v676 = vsel %vm669, %v675, 0.0
  %677 = vadd.xlane.f32.xlu0 %v676
  %v678 = vpop.xlane.xlu0 %677
  %v679 = vrcp.pop %v678
  %v680 = vmul.f32 %v675, %v679
  %v681 = vsel %vm669, %v625, -inf
  %682 = vmax.xlane.f32.xlu0 %v681
  %v683 = vpop.xlane.xlu0 %682
  %v684 = vsub.f32 %v625, %v683
  %v685 = vmul.f32 %v684, 1.442695
  %v686 = vpow.pop %v685
  %v687 = vsel %vm669, %v686, 0.0
  %688 = vadd.xlane.f32.xlu0 %v687
  %v689 = vpop.xlane.xlu0 %688
  %v690 = vrcp.pop %v689
  %v691 = vmul.f32 %v686, %v690
  %v692 = vsel %vm669, %v664, -inf
  %693 = vmax.xlane.f32.xlu0 %v692
  %v694 = vpop.xlane.xlu0 %693
  %v695 = vsub.f32 %v664, %v694
  %v696 = vmul.f32 %v695, 1.442695
  %v697 = vpow.pop %v696
  %v698 = vsel %vm669, %v697, 0.0
  %699 = vadd.xlane.f32.xlu0 %v698
  %v700 = vpop.xlane.xlu0 %699
  %v701 = vrcp.pop %v700
  %v702 = vmul.f32 %v697, %v701
  %v707 = vcombine.low %v220, %v680
  %v708 = vcombine.low %v691, %v702
  %v710 = vunpack.c.l.s4 1983009808
  %v711 = vunpack.c.0.s8 %v710
  %v712 = vlaneseq
  %v713 = vshrl.u32 %v712, 7
  %v714 = vsub.s32 %v711, %v713
  %v715 = vrot.slane %v707, %v714
  %v717 = vunpack.c.l.s4 1983009808
  %v718 = vunpack.c.0.s8 %v717
  %v719 = vlaneseq
  %v720 = vshrl.u32 %v719, 7
  %v721 = vsub.s32 %v718, %v720
  %v722 = vrot.slane %v708, %v721
  %v723 = vcombine.low %v715, %v722
  %725 = vst [vmem:[%s6] sm:$0xff] %v723
  // Predicated region
  $region26: #{_lambda_.13} parent=0 // pred_check
    _
  $region27: #{_lambda_.13} parent=0 // pred_check_branch
    %727 = sbr.rel (0) target = $region29
  $region28: #{_lambda_.13} parent=0 // pred_region
    _
  $region29: #{_lambda_.13} parent=0 // pred_fallthru
    _
  // Predicated region
  $region30: #{_lambda_.13} parent=0 // pred_check
    _
  $region31: #{_lambda_.13} parent=0 // pred_check_branch
    %729 = sbr.rel (0) target = $region33
  $region32: #{_lambda_.13} parent=0 // pred_region
    _
  $region33: #{_lambda_.13} parent=0 // pred_fallthru
    _

</llo_original>
